<compile_context>
chip_gen: v7x
topology: tpu7x:2x2x1
jax: 0.10.0
libtpu: 0.0.40
codegen_flags: <defaults>
</compile_context>

<pallas_src>
import numpy as np
import jax
import jax.numpy as jnp
from jax import lax
from jax.experimental import pallas as pl
from jax.experimental.pallas import tpu as pltpu

EPS = 1e-5                      # torch.nn.LayerNorm default eps
_INV_SQRT2 = 0.7071067811865476


def _rpad(v, m):
    """Round v up to a multiple of m."""
    return ((v + m - 1) // m) * m


def gelu_exact(v):
    """Exact (erf-based) GELU, matching torch.nn.GELU() default."""
    return 0.5 * v * (1.0 + lax.erf(v * _INV_SQRT2))


# ---------------------------------------------------------------------------
# Parameter setup glue (deterministic, plain JAX / numpy)
# ---------------------------------------------------------------------------
def make_params(key, dim, num_patch, token_dim, channel_dim):
    """Synthetic MixerBlock weights.

    Returns (pad_params, raw_params):
      raw_params: unpadded f32 weights, used by the pure-JAX reference.
      pad_params: layout-optimized for the kernel:
        - dim / token_dim / channel_dim zero-padded to 128 (lane-dense),
          num_patch only to a multiple of 8 (sublane);
        - token-mixer matmul weights stored pre-transposed (wt1^T, wt2^T) in bf16,
          their biases as f32 column vectors;
        - channel-mixer matmul weights in bf16, biases / LN affine as f32 rows;
        - a (1, Dp) f32 lane mask for the padded d lanes.
    """
    ks = jax.random.split(key, 12)

    def lin_w(k, fin, fout):
        bound = 1.0 / np.sqrt(fin)
        return jax.random.uniform(k, (fin, fout), jnp.float32, -bound, bound)

    def lin_b(k, fin, fout):
        bound = 1.0 / np.sqrt(fin)
        return jax.random.uniform(k, (fout,), jnp.float32, -bound, bound)

    g1 = 1.0 + 0.1 * jax.random.normal(ks[0], (dim,), jnp.float32)
    be1 = 0.1 * jax.random.normal(ks[1], (dim,), jnp.float32)
    g2 = 1.0 + 0.1 * jax.random.normal(ks[2], (dim,), jnp.float32)
    be2 = 0.1 * jax.random.normal(ks[3], (dim,), jnp.float32)

    wt1 = lin_w(ks[4], num_patch, token_dim)
    bt1 = lin_b(ks[5], num_patch, token_dim)
    wt2 = lin_w(ks[6], token_dim, num_patch)
    bt2 = lin_b(ks[7], token_dim, num_patch)
    wc1 = lin_w(ks[8], dim, channel_dim)
    bc1 = lin_b(ks[9], dim, channel_dim)
    wc2 = lin_w(ks[10], channel_dim, dim)
    bc2 = lin_b(ks[11], channel_dim, dim)

    raw = dict(g1=g1, be1=be1, wt1=wt1, bt1=bt1, wt2=wt2, bt2=bt2,
               g2=g2, be2=be2, wc1=wc1, bc1=bc1, wc2=wc2, bc2=bc2)

    Dp = _rpad(dim, 128)          # lane-dense
    Ns = _rpad(num_patch, 8)      # sublane granularity only (feedback: stop 8x over-pad)
    Tp = _rpad(token_dim, 128)    # lane-dense
    Cp = _rpad(channel_dim, 128)  # lane-dense

    def pad_mat(w, r, c):         # zero-pad and cast to bf16 (MXU-native)
        return jnp.pad(w, ((0, r - w.shape[0]), (0, c - w.shape[1]))).astype(jnp.bfloat16)

    def pad_row(v, c):            # zero-pad, f32 row (1, c)
        return jnp.pad(v, (0, c - v.shape[0])).reshape(1, c).astype(jnp.float32)

    def pad_col(v, r):            # zero-pad, f32 column (r, 1)
        return jnp.pad(v, (0, r - v.shape[0])).reshape(r, 1).astype(jnp.float32)

    # Hoisted padded-d-lane mask (resident kernel input).
    dmask = (jnp.arange(Dp) < dim).astype(jnp.float32).reshape(1, Dp)

    pad = dict(
        dmask=dmask,
        g1=pad_row(g1, Dp), be1=pad_row(be1, Dp),
        g2=pad_row(g2, Dp), be2=pad_row(be2, Dp),
        wt1t=pad_mat(wt1.T, Tp, Ns), bt1=pad_col(bt1, Tp),   # pre-transposed token weights
        wt2t=pad_mat(wt2.T, Ns, Tp), bt2=pad_col(bt2, Ns),
        wc1=pad_mat(wc1, Dp, Cp), bc1=pad_row(bc1, Cp),
        wc2=pad_mat(wc2, Cp, Dp), bc2=pad_row(bc2, Dp),
    )
    return pad, raw


# ---------------------------------------------------------------------------
# Pallas kernel: Bb batch elements (each a (Ns, Dp) slab) per grid step
# ---------------------------------------------------------------------------
def make_mixer_kernel(block_batch, d_actual, eps):
    inv_d = 1.0 / float(d_actual)

    def kernel(x_ref, dmask_ref, g1_ref, be1_ref, wt1t_ref, bt1_ref,
               wt2t_ref, bt2_ref, g2_ref, be2_ref, wc1_ref, bc1_ref,
               wc2_ref, bc2_ref, o_ref):
        Bb, Ns, Dp = x_ref.shape
        dmask = dmask_ref[...]                     # (1, Dp) f32, 1 on real d lanes

        def layernorm(v, g, b):
            # Two-pass (centered) variance for robustness; padded d lanes masked so
            # they never pollute the statistics. gamma/beta are zero-padded, so
            # padded output lanes come out exactly zero.
            mu = jnp.sum(v, axis=-1, keepdims=True) * inv_d
            diff = (v - mu) * dmask
            var = jnp.sum(diff * diff, axis=-1, keepdims=True) * inv_d
            return diff * lax.rsqrt(var + eps) * g + b

        g1, be1 = g1_ref[...], be1_ref[...]
        wt1t, bt1 = wt1t_ref[...], bt1_ref[...]    # (Tp, Ns) bf16, (Tp, 1) f32
        wt2t, bt2 = wt2t_ref[...], bt2_ref[...]    # (Ns, Tp) bf16, (Ns, 1) f32

        # ---------------- token mixer (per element, statically unrolled) ----------------
        # Pre-transposed weights remove both activation transposes:
        #   h^T  = wt1^T @ y        (Tp, Dp)
        #   tok  = wt2^T @ gelu(h^T) (Ns, Dp)
        for b in range(block_batch):
            xb = x_ref[b]                                          # (Ns, Dp) f32
            yb = layernorm(xb, g1, be1)
            h = jnp.dot(wt1t, yb.astype(jnp.bfloat16),
                        preferred_element_type=jnp.float32) + bt1  # (Tp, Dp)
            h = gelu_exact(h)
            tok = jnp.dot(wt2t, h.astype(jnp.bfloat16),
                          preferred_element_type=jnp.float32) + bt2  # (Ns, Dp)
            # Biases leak into padded d lanes; mask so LN2 sums only see real lanes.
            o_ref[b] = xb + tok * dmask                            # residual 1

        # ---------------- channel mixer (one flattened GEMM for the whole block) --------
        x1 = o_ref[...].reshape(Bb * Ns, Dp)
        z = layernorm(x1, g2_ref[...], be2_ref[...])
        h2 = jnp.dot(z.astype(jnp.bfloat16), wc1_ref[...],
                     preferred_element_type=jnp.float32) + bc1_ref[...]   # (Bb*Ns, Cp)
        h2 = gelu_exact(h2)
        c = jnp.dot(h2.astype(jnp.bfloat16), wc2_ref[...],
                    preferred_element_type=jnp.float32) + bc2_ref[...]    # (Bb*Ns, Dp)
        o_ref[...] = (x1 + c).reshape(Bb, Ns, Dp)                  # residual 2

    return kernel


def mixer_block_forward(x, p, *, block_batch=8, eps=EPS):
    """x: (b, n, d) f32. Returns (b, n, d) f32."""
    b, n, d = x.shape
    Tp, Ns = p["wt1t"].shape
    Dp, Cp = p["wc1"].shape

    # Batch folding: Bb elements per grid step; keep >= 2 parallel steps when
    # batch >= 2 so both v7x TensorCores stay busy.
    Bb = max(1, min(block_batch, b))
    if b >= 2 and (b + Bb - 1) // Bb < 2:
        Bb = (b + 1) // 2
    b_pad = ((b + Bb - 1) // Bb) * Bb
    grid = (b_pad // Bb,)

    # Host-glue zero padding (padded lanes / rows must stay zero on input).
    xp = jnp.pad(x, ((0, b_pad - b), (0, Ns - n), (0, Dp - d)))

    args = (xp, p["dmask"], p["g1"], p["be1"], p["wt1t"], p["bt1"],
            p["wt2t"], p["bt2"], p["g2"], p["be2"], p["wc1"], p["bc1"],
            p["wc2"], p["bc2"])

    def resident(shape):
        # Constant index_map -> weights stay in VMEM across all grid steps.
        # (pipeline_mode=pl.Buffered(1) would halve their buffering; skipped — they
        #  are tiny at these shapes, revisit when dim/token_dim/channel_dim scale up.)
        return pl.BlockSpec(shape, lambda i: (0,) * len(shape))

    in_specs = [
        pl.BlockSpec((Bb, Ns, Dp), lambda i: (i, 0, 0)),   # x: Bb batch elems / step
        resident((1, Dp)),                                 # dmask
        resident((1, Dp)), resident((1, Dp)),              # g1, be1
        resident((Tp, Ns)), resident((Tp, 1)),             # wt1^T, bt1 (column)
        resident((Ns, Tp)), resident((Ns, 1)),             # wt2^T, bt2 (column)
        resident((1, Dp)), resident((1, Dp)),              # g2, be2
        resident((Dp, Cp)), resident((1, Cp)),             # wc1, bc1
        resident((Cp, Dp)), resident((1, Dp)),             # wc2, bc2
    ]
    out_spec = pl.BlockSpec((Bb, Ns, Dp), lambda i: (i, 0, 0))

    # Advisory cost estimate for XLA's scheduler.
    flops = int(b_pad * (4 * Tp * Ns * Dp + 4 * Ns * Dp * Cp))
    transcendentals = int(b_pad * (Tp * Dp + Ns * Cp))
    weight_bytes = int(2 * (Tp * Ns + Ns * Tp + Dp * Cp + Cp * Dp)
                       + 4 * (7 * Dp + Tp + Ns + Cp))
    bytes_accessed = int(2 * b_pad * Ns * Dp * 4 + weight_bytes)

    # Explicit VMEM budget: double-buffered in/out blocks + resident weights +
    # in-kernel intermediates, clamped to a v7x-safe ceiling.
    block_bytes = Bb * Ns * Dp * 4
    interm_bytes = Bb * Ns * Cp * 4 + Tp * Dp * 4 + 2 * block_bytes
    vmem_est = 4 * block_bytes + 2 * weight_bytes + 2 * interm_bytes + (4 << 20)
    vmem_limit = int(min(48 << 20, max(16 << 20, vmem_est)))

    out_pad = pl.pallas_call(
        make_mixer_kernel(Bb, d, eps),
        out_shape=jax.ShapeDtypeStruct((b_pad, Ns, Dp), jnp.float32),
        grid_spec=pltpu.PrefetchScalarGridSpec(
            num_scalar_prefetch=0,
            grid=grid,
            in_specs=in_specs,
            out_specs=out_spec,
        ),
        compiler_params=pltpu.CompilerParams(
            dimension_semantics=("parallel",),       # megacore sharding on v7x
            vmem_limit_bytes=vmem_limit),
        cost_estimate=pl.CostEstimate(
            flops=flops, transcendentals=transcendentals,
            bytes_accessed=bytes_accessed),
    )(*args)

    return out_pad[:b, :n, :d]


# ---------------------------------------------------------------------------
# Plain-JAX f32 reference (mirrors the PyTorch MixerBlock forward)
# ---------------------------------------------------------------------------
def reference_forward(x, raw, eps=EPS):
    def layernorm(v, g, b):
        mu = jnp.mean(v, axis=-1, keepdims=True)
        var = jnp.mean((v - mu) ** 2, axis=-1, keepdims=True)
        return (v - mu) / jnp.sqrt(var + eps) * g + b

    y = layernorm(x, raw["g1"], raw["be1"])
    y = jnp.swapaxes(y, 1, 2)                          # b n d -> b d n
    h = gelu_exact(y @ raw["wt1"] + raw["bt1"])        # Linear(n -> token_dim)
    y = h @ raw["wt2"] + raw["bt2"]                    # Linear(token_dim -> n)
    y = jnp.swapaxes(y, 1, 2)                          # b d n -> b n d
    x = x + y

    z = layernorm(x, raw["g2"], raw["be2"])
    h2 = gelu_exact(z @ raw["wc1"] + raw["bc1"])       # Linear(d -> channel_dim)
    return x + (h2 @ raw["wc2"] + raw["bc2"])          # Linear(channel_dim -> d)


if __name__ == "__main__":
    batch, num_patch, dim = 8, 16, 32
    token_dim, channel_dim = 64, 128

    key = jax.random.PRNGKey(0)
    k_x, k_p = jax.random.split(key)

    x = jax.random.normal(k_x, (batch, num_patch, dim), jnp.float32)
    pad_params, raw_params = make_params(k_p, dim, num_patch, token_dim, channel_dim)

    out = jax.block_until_ready(mixer_block_forward(x, pad_params))
    ref = jax.block_until_ready(reference_forward(x, raw_params))

    assert out.shape == (batch, num_patch, dim)
    # bf16 matmul operands with f32 accumulation -> allow ~1% deviation from f32 ref.
    np.testing.assert_allclose(np.asarray(out), np.asarray(ref), rtol=2e-2, atol=2e-2)
    print("KERNEL_OK")
</pallas_src>

<mosaic_0001>
module attributes {stable_mosaic.version = 11 : i64} {
  func.func @kernel(%arg0: i32, %arg1: memref<4x16x128xf32, #tpu.memory_space<vmem>>, %arg2: memref<1x128xf32, #tpu.memory_space<vmem>>, %arg3: memref<1x128xf32, #tpu.memory_space<vmem>>, %arg4: memref<1x128xf32, #tpu.memory_space<vmem>>, %arg5: memref<128x16xbf16, #tpu.memory_space<vmem>>, %arg6: memref<128x1xf32, #tpu.memory_space<vmem>>, %arg7: memref<16x128xbf16, #tpu.memory_space<vmem>>, %arg8: memref<16x1xf32, #tpu.memory_space<vmem>>, %arg9: memref<1x128xf32, #tpu.memory_space<vmem>>, %arg10: memref<1x128xf32, #tpu.memory_space<vmem>>, %arg11: memref<128x128xbf16, #tpu.memory_space<vmem>>, %arg12: memref<1x128xf32, #tpu.memory_space<vmem>>, %arg13: memref<128x128xbf16, #tpu.memory_space<vmem>>, %arg14: memref<1x128xf32, #tpu.memory_space<vmem>>, %arg15: memref<4x16x128xf32, #tpu.memory_space<vmem>>) attributes {dimension_semantics = [#tpu.dimension_semantics<parallel>], iteration_bounds = array<i64: 2>, scalar_prefetch = 0 : i64, scratch_operands = 0 : i64, tpu.core_type = #tpu.core_type<tc>, window_params = [{transform_indices = @transform_0, window_bounds = array<i64: 4, 16, 128>}, {pipeline_mode = #tpu.pipeline_mode<synchronous>, transform_indices = @transform_1, window_bounds = array<i64: 1, 128>}, {pipeline_mode = #tpu.pipeline_mode<synchronous>, transform_indices = @transform_2, window_bounds = array<i64: 1, 128>}, {pipeline_mode = #tpu.pipeline_mode<synchronous>, transform_indices = @transform_3, window_bounds = array<i64: 1, 128>}, {pipeline_mode = #tpu.pipeline_mode<synchronous>, transform_indices = @transform_4, window_bounds = array<i64: 128, 16>}, {pipeline_mode = #tpu.pipeline_mode<synchronous>, transform_indices = @transform_5, window_bounds = array<i64: 128, 1>}, {pipeline_mode = #tpu.pipeline_mode<synchronous>, transform_indices = @transform_6, window_bounds = array<i64: 16, 128>}, {pipeline_mode = #tpu.pipeline_mode<synchronous>, transform_indices = @transform_7, window_bounds = array<i64: 16, 1>}, {pipeline_mode = #tpu.pipeline_mode<synchronous>, transform_indices = @transform_8, window_bounds = array<i64: 1, 128>}, {pipeline_mode = #tpu.pipeline_mode<synchronous>, transform_indices = @transform_9, window_bounds = array<i64: 1, 128>}, {pipeline_mode = #tpu.pipeline_mode<synchronous>, transform_indices = @transform_10, window_bounds = array<i64: 128, 128>}, {pipeline_mode = #tpu.pipeline_mode<synchronous>, transform_indices = @transform_11, window_bounds = array<i64: 1, 128>}, {pipeline_mode = #tpu.pipeline_mode<synchronous>, transform_indices = @transform_12, window_bounds = array<i64: 128, 128>}, {pipeline_mode = #tpu.pipeline_mode<synchronous>, transform_indices = @transform_13, window_bounds = array<i64: 1, 128>}, {transform_indices = @transform_14, window_bounds = array<i64: 4, 16, 128>}]} {
    %c0 = arith.constant 0 : index
    %c0_0 = arith.constant 0 : index
    %0 = vector.load %arg2[%c0, %c0_0] : memref<1x128xf32, #tpu.memory_space<vmem>>, vector<1x128xf32>
    %c0_1 = arith.constant 0 : index
    %c0_2 = arith.constant 0 : index
    %1 = vector.load %arg3[%c0_1, %c0_2] : memref<1x128xf32, #tpu.memory_space<vmem>>, vector<1x128xf32>
    %c0_3 = arith.constant 0 : index
    %c0_4 = arith.constant 0 : index
    %2 = vector.load %arg4[%c0_3, %c0_4] : memref<1x128xf32, #tpu.memory_space<vmem>>, vector<1x128xf32>
    %c0_5 = arith.constant 0 : index
    %c0_6 = arith.constant 0 : index
    %3 = vector.load %arg5[%c0_5, %c0_6] : memref<128x16xbf16, #tpu.memory_space<vmem>>, vector<128x16xbf16>
    %c0_7 = arith.constant 0 : index
    %c0_8 = arith.constant 0 : index
    %4 = vector.load %arg6[%c0_7, %c0_8] : memref<128x1xf32, #tpu.memory_space<vmem>>, vector<128x1xf32>
    %c0_9 = arith.constant 0 : index
    %c0_10 = arith.constant 0 : index
    %5 = vector.load %arg7[%c0_9, %c0_10] : memref<16x128xbf16, #tpu.memory_space<vmem>>, vector<16x128xbf16>
    %c0_11 = arith.constant 0 : index
    %c0_12 = arith.constant 0 : index
    %6 = vector.load %arg8[%c0_11, %c0_12] : memref<16x1xf32, #tpu.memory_space<vmem>>, vector<16x1xf32>
    %c0_13 = arith.constant 0 : index
    %c0_14 = arith.constant 0 : index
    %c0_15 = arith.constant 0 : index
    %7 = vector.load %arg1[%c0_13, %c0_14, %c0_15] : memref<4x16x128xf32, #tpu.memory_space<vmem>>, vector<1x16x128xf32>
    %8 = vector.shape_cast %7 : vector<1x16x128xf32> to vector<16x128xf32>
    %cst = arith.constant dense<0.000000e+00> : vector<16xf32>
    %9 = vector.multi_reduction <add>, %8, %cst [1] : vector<16x128xf32> to vector<16xf32>
    %10 = vector.shape_cast %9 : vector<16xf32> to vector<16x1xf32>
    %cst_16 = arith.constant 3.125000e-02 : f32
    %11 = vector.broadcast %cst_16 : f32 to vector<16x1xf32>
    %12 = arith.mulf %10, %11 : vector<16x1xf32>
    %13 = vector.broadcast %12 : vector<16x1xf32> to vector<16x128xf32>
    %14 = arith.subf %8, %13 : vector<16x128xf32>
    %15 = vector.broadcast %0 : vector<1x128xf32> to vector<16x128xf32>
    %16 = arith.mulf %14, %15 : vector<16x128xf32>
    %17 = arith.mulf %16, %16 : vector<16x128xf32>
    %cst_17 = arith.constant dense<0.000000e+00> : vector<16xf32>
    %18 = vector.multi_reduction <add>, %17, %cst_17 [1] : vector<16x128xf32> to vector<16xf32>
    %19 = vector.shape_cast %18 : vector<16xf32> to vector<16x1xf32>
    %cst_18 = arith.constant 3.125000e-02 : f32
    %20 = vector.broadcast %cst_18 : f32 to vector<16x1xf32>
    %21 = arith.mulf %19, %20 : vector<16x1xf32>
    %cst_19 = arith.constant 9.99999974E-6 : f32
    %22 = vector.broadcast %cst_19 : f32 to vector<16x1xf32>
    %23 = arith.addf %21, %22 : vector<16x1xf32>
    %24 = math.rsqrt %23 : vector<16x1xf32>
    %25 = vector.broadcast %24 : vector<16x1xf32> to vector<16x128xf32>
    %26 = arith.mulf %16, %25 : vector<16x128xf32>
    %27 = vector.broadcast %1 : vector<1x128xf32> to vector<16x128xf32>
    %28 = arith.mulf %26, %27 : vector<16x128xf32>
    %29 = vector.broadcast %2 : vector<1x128xf32> to vector<16x128xf32>
    %30 = arith.addf %28, %29 : vector<16x128xf32>
    %31 = arith.truncf %30 : vector<16x128xf32> to vector<16x128xbf16>
    %cst_20 = arith.constant dense<0.000000e+00> : vector<128x128xf32>
    %32 = tpu.matmul %3, %31, %cst_20 {dimension_numbers = #tpu.dot_dimension_numbers<[1], [0], [0], [1], [0, 0, 1, 1], [], []>} : vector<128x16xbf16>, vector<16x128xbf16>, vector<128x128xf32> -> vector<128x128xf32>
    %33 = vector.broadcast %4 : vector<128x1xf32> to vector<128x128xf32>
    %34 = arith.addf %32, %33 : vector<128x128xf32>
    %cst_21 = arith.constant 5.000000e-01 : f32
    %35 = vector.broadcast %cst_21 : f32 to vector<128x128xf32>
    %36 = arith.mulf %35, %34 : vector<128x128xf32>
    %cst_22 = arith.constant 0.707106769 : f32
    %37 = vector.broadcast %cst_22 : f32 to vector<128x128xf32>
    %38 = arith.mulf %34, %37 : vector<128x128xf32>
    %39 = math.erf %38 : vector<128x128xf32>
    %cst_23 = arith.constant 1.000000e+00 : f32
    %40 = vector.broadcast %cst_23 : f32 to vector<128x128xf32>
    %41 = arith.addf %40, %39 : vector<128x128xf32>
    %42 = arith.mulf %36, %41 : vector<128x128xf32>
    %43 = arith.truncf %42 : vector<128x128xf32> to vector<128x128xbf16>
    %cst_24 = arith.constant dense<0.000000e+00> : vector<16x128xf32>
    %44 = tpu.matmul %5, %43, %cst_24 {dimension_numbers = #tpu.dot_dimension_numbers<[1], [0], [0], [1], [0, 0, 1, 1], [], []>} : vector<16x128xbf16>, vector<128x128xbf16>, vector<16x128xf32> -> vector<16x128xf32>
    %45 = vector.broadcast %6 : vector<16x1xf32> to vector<16x128xf32>
    %46 = arith.addf %44, %45 : vector<16x128xf32>
    %47 = vector.broadcast %0 : vector<1x128xf32> to vector<16x128xf32>
    %48 = arith.mulf %46, %47 : vector<16x128xf32>
    %49 = arith.addf %8, %48 : vector<16x128xf32>
    %c0_25 = arith.constant 0 : index
    %c0_26 = arith.constant 0 : index
    %c0_27 = arith.constant 0 : index
    %50 = vector.load %arg15[%c0_25, %c0_26, %c0_27] : memref<4x16x128xf32, #tpu.memory_space<vmem>>, vector<1x16x128xf32>
    %51 = vector.shape_cast %50 : vector<1x16x128xf32> to vector<16x128xf32>
    %52 = vector.shape_cast %49 : vector<16x128xf32> to vector<1x16x128xf32>
    tpu.vector_store %arg15[%c0_25, %c0_26, %c0_27], %52 {strides = array<i32>} : memref<4x16x128xf32, #tpu.memory_space<vmem>>, vector<1x16x128xf32>,
    %c1 = arith.constant 1 : index
    %c0_28 = arith.constant 0 : index
    %c0_29 = arith.constant 0 : index
    %53 = vector.load %arg1[%c1, %c0_28, %c0_29] : memref<4x16x128xf32, #tpu.memory_space<vmem>>, vector<1x16x128xf32>
    %54 = vector.shape_cast %53 : vector<1x16x128xf32> to vector<16x128xf32>
    %cst_30 = arith.constant dense<0.000000e+00> : vector<16xf32>
    %55 = vector.multi_reduction <add>, %54, %cst_30 [1] : vector<16x128xf32> to vector<16xf32>
    %56 = vector.shape_cast %55 : vector<16xf32> to vector<16x1xf32>
    %cst_31 = arith.constant 3.125000e-02 : f32
    %57 = vector.broadcast %cst_31 : f32 to vector<16x1xf32>
    %58 = arith.mulf %56, %57 : vector<16x1xf32>
    %59 = vector.broadcast %58 : vector<16x1xf32> to vector<16x128xf32>
    %60 = arith.subf %54, %59 : vector<16x128xf32>
    %61 = vector.broadcast %0 : vector<1x128xf32> to vector<16x128xf32>
    %62 = arith.mulf %60, %61 : vector<16x128xf32>
    %63 = arith.mulf %62, %62 : vector<16x128xf32>
    %cst_32 = arith.constant dense<0.000000e+00> : vector<16xf32>
    %64 = vector.multi_reduction <add>, %63, %cst_32 [1] : vector<16x128xf32> to vector<16xf32>
    %65 = vector.shape_cast %64 : vector<16xf32> to vector<16x1xf32>
    %cst_33 = arith.constant 3.125000e-02 : f32
    %66 = vector.broadcast %cst_33 : f32 to vector<16x1xf32>
    %67 = arith.mulf %65, %66 : vector<16x1xf32>
    %cst_34 = arith.constant 9.99999974E-6 : f32
    %68 = vector.broadcast %cst_34 : f32 to vector<16x1xf32>
    %69 = arith.addf %67, %68 : vector<16x1xf32>
    %70 = math.rsqrt %69 : vector<16x1xf32>
    %71 = vector.broadcast %70 : vector<16x1xf32> to vector<16x128xf32>
    %72 = arith.mulf %62, %71 : vector<16x128xf32>
    %73 = vector.broadcast %1 : vector<1x128xf32> to vector<16x128xf32>
    %74 = arith.mulf %72, %73 : vector<16x128xf32>
    %75 = vector.broadcast %2 : vector<1x128xf32> to vector<16x128xf32>
    %76 = arith.addf %74, %75 : vector<16x128xf32>
    %77 = arith.truncf %76 : vector<16x128xf32> to vector<16x128xbf16>
    %cst_35 = arith.constant dense<0.000000e+00> : vector<128x128xf32>
    %78 = tpu.matmul %3, %77, %cst_35 {dimension_numbers = #tpu.dot_dimension_numbers<[1], [0], [0], [1], [0, 0, 1, 1], [], []>} : vector<128x16xbf16>, vector<16x128xbf16>, vector<128x128xf32> -> vector<128x128xf32>
    %79 = vector.broadcast %4 : vector<128x1xf32> to vector<128x128xf32>
    %80 = arith.addf %78, %79 : vector<128x128xf32>
    %cst_36 = arith.constant 5.000000e-01 : f32
    %81 = vector.broadcast %cst_36 : f32 to vector<128x128xf32>
    %82 = arith.mulf %81, %80 : vector<128x128xf32>
    %cst_37 = arith.constant 0.707106769 : f32
    %83 = vector.broadcast %cst_37 : f32 to vector<128x128xf32>
    %84 = arith.mulf %80, %83 : vector<128x128xf32>
    %85 = math.erf %84 : vector<128x128xf32>
    %cst_38 = arith.constant 1.000000e+00 : f32
    %86 = vector.broadcast %cst_38 : f32 to vector<128x128xf32>
    %87 = arith.addf %86, %85 : vector<128x128xf32>
    %88 = arith.mulf %82, %87 : vector<128x128xf32>
    %89 = arith.truncf %88 : vector<128x128xf32> to vector<128x128xbf16>
    %cst_39 = arith.constant dense<0.000000e+00> : vector<16x128xf32>
    %90 = tpu.matmul %5, %89, %cst_39 {dimension_numbers = #tpu.dot_dimension_numbers<[1], [0], [0], [1], [0, 0, 1, 1], [], []>} : vector<16x128xbf16>, vector<128x128xbf16>, vector<16x128xf32> -> vector<16x128xf32>
    %91 = vector.broadcast %6 : vector<16x1xf32> to vector<16x128xf32>
    %92 = arith.addf %90, %91 : vector<16x128xf32>
    %93 = vector.broadcast %0 : vector<1x128xf32> to vector<16x128xf32>
    %94 = arith.mulf %92, %93 : vector<16x128xf32>
    %95 = arith.addf %54, %94 : vector<16x128xf32>
    %c1_40 = arith.constant 1 : index
    %c0_41 = arith.constant 0 : index
    %c0_42 = arith.constant 0 : index
    %96 = vector.load %arg15[%c1_40, %c0_41, %c0_42] : memref<4x16x128xf32, #tpu.memory_space<vmem>>, vector<1x16x128xf32>
    %97 = vector.shape_cast %96 : vector<1x16x128xf32> to vector<16x128xf32>
    %98 = vector.shape_cast %95 : vector<16x128xf32> to vector<1x16x128xf32>
    tpu.vector_store %arg15[%c1_40, %c0_41, %c0_42], %98 {strides = array<i32>} : memref<4x16x128xf32, #tpu.memory_space<vmem>>, vector<1x16x128xf32>,
    %c2 = arith.constant 2 : index
    %c0_43 = arith.constant 0 : index
    %c0_44 = arith.constant 0 : index
    %99 = vector.load %arg1[%c2, %c0_43, %c0_44] : memref<4x16x128xf32, #tpu.memory_space<vmem>>, vector<1x16x128xf32>
    %100 = vector.shape_cast %99 : vector<1x16x128xf32> to vector<16x128xf32>
    %cst_45 = arith.constant dense<0.000000e+00> : vector<16xf32>
    %101 = vector.multi_reduction <add>, %100, %cst_45 [1] : vector<16x128xf32> to vector<16xf32>
    %102 = vector.shape_cast %101 : vector<16xf32> to vector<16x1xf32>
    %cst_46 = arith.constant 3.125000e-02 : f32
    %103 = vector.broadcast %cst_46 : f32 to vector<16x1xf32>
    %104 = arith.mulf %102, %103 : vector<16x1xf32>
    %105 = vector.broadcast %104 : vector<16x1xf32> to vector<16x128xf32>
    %106 = arith.subf %100, %105 : vector<16x128xf32>
    %107 = vector.broadcast %0 : vector<1x128xf32> to vector<16x128xf32>
    %108 = arith.mulf %106, %107 : vector<16x128xf32>
    %109 = arith.mulf %108, %108 : vector<16x128xf32>
    %cst_47 = arith.constant dense<0.000000e+00> : vector<16xf32>
    %110 = vector.multi_reduction <add>, %109, %cst_47 [1] : vector<16x128xf32> to vector<16xf32>
    %111 = vector.shape_cast %110 : vector<16xf32> to vector<16x1xf32>
    %cst_48 = arith.constant 3.125000e-02 : f32
    %112 = vector.broadcast %cst_48 : f32 to vector<16x1xf32>
    %113 = arith.mulf %111, %112 : vector<16x1xf32>
    %cst_49 = arith.constant 9.99999974E-6 : f32
    %114 = vector.broadcast %cst_49 : f32 to vector<16x1xf32>
    %115 = arith.addf %113, %114 : vector<16x1xf32>
    %116 = math.rsqrt %115 : vector<16x1xf32>
    %117 = vector.broadcast %116 : vector<16x1xf32> to vector<16x128xf32>
    %118 = arith.mulf %108, %117 : vector<16x128xf32>
    %119 = vector.broadcast %1 : vector<1x128xf32> to vector<16x128xf32>
    %120 = arith.mulf %118, %119 : vector<16x128xf32>
    %121 = vector.broadcast %2 : vector<1x128xf32> to vector<16x128xf32>
    %122 = arith.addf %120, %121 : vector<16x128xf32>
    %123 = arith.truncf %122 : vector<16x128xf32> to vector<16x128xbf16>
    %cst_50 = arith.constant dense<0.000000e+00> : vector<128x128xf32>
    %124 = tpu.matmul %3, %123, %cst_50 {dimension_numbers = #tpu.dot_dimension_numbers<[1], [0], [0], [1], [0, 0, 1, 1], [], []>} : vector<128x16xbf16>, vector<16x128xbf16>, vector<128x128xf32> -> vector<128x128xf32>
    %125 = vector.broadcast %4 : vector<128x1xf32> to vector<128x128xf32>
    %126 = arith.addf %124, %125 : vector<128x128xf32>
    %cst_51 = arith.constant 5.000000e-01 : f32
    %127 = vector.broadcast %cst_51 : f32 to vector<128x128xf32>
    %128 = arith.mulf %127, %126 : vector<128x128xf32>
    %cst_52 = arith.constant 0.707106769 : f32
    %129 = vector.broadcast %cst_52 : f32 to vector<128x128xf32>
    %130 = arith.mulf %126, %129 : vector<128x128xf32>
    %131 = math.erf %130 : vector<128x128xf32>
    %cst_53 = arith.constant 1.000000e+00 : f32
    %132 = vector.broadcast %cst_53 : f32 to vector<128x128xf32>
    %133 = arith.addf %132, %131 : vector<128x128xf32>
    %134 = arith.mulf %128, %133 : vector<128x128xf32>
    %135 = arith.truncf %134 : vector<128x128xf32> to vector<128x128xbf16>
    %cst_54 = arith.constant dense<0.000000e+00> : vector<16x128xf32>
    %136 = tpu.matmul %5, %135, %cst_54 {dimension_numbers = #tpu.dot_dimension_numbers<[1], [0], [0], [1], [0, 0, 1, 1], [], []>} : vector<16x128xbf16>, vector<128x128xbf16>, vector<16x128xf32> -> vector<16x128xf32>
    %137 = vector.broadcast %6 : vector<16x1xf32> to vector<16x128xf32>
    %138 = arith.addf %136, %137 : vector<16x128xf32>
    %139 = vector.broadcast %0 : vector<1x128xf32> to vector<16x128xf32>
    %140 = arith.mulf %138, %139 : vector<16x128xf32>
    %141 = arith.addf %100, %140 : vector<16x128xf32>
    %c2_55 = arith.constant 2 : index
    %c0_56 = arith.constant 0 : index
    %c0_57 = arith.constant 0 : index
    %142 = vector.load %arg15[%c2_55, %c0_56, %c0_57] : memref<4x16x128xf32, #tpu.memory_space<vmem>>, vector<1x16x128xf32>
    %143 = vector.shape_cast %142 : vector<1x16x128xf32> to vector<16x128xf32>
    %144 = vector.shape_cast %141 : vector<16x128xf32> to vector<1x16x128xf32>
    tpu.vector_store %arg15[%c2_55, %c0_56, %c0_57], %144 {strides = array<i32>} : memref<4x16x128xf32, #tpu.memory_space<vmem>>, vector<1x16x128xf32>,
    %c3 = arith.constant 3 : index
    %c0_58 = arith.constant 0 : index
    %c0_59 = arith.constant 0 : index
    %145 = vector.load %arg1[%c3, %c0_58, %c0_59] : memref<4x16x128xf32, #tpu.memory_space<vmem>>, vector<1x16x128xf32>
    %146 = vector.shape_cast %145 : vector<1x16x128xf32> to vector<16x128xf32>
    %cst_60 = arith.constant dense<0.000000e+00> : vector<16xf32>
    %147 = vector.multi_reduction <add>, %146, %cst_60 [1] : vector<16x128xf32> to vector<16xf32>
    %148 = vector.shape_cast %147 : vector<16xf32> to vector<16x1xf32>
    %cst_61 = arith.constant 3.125000e-02 : f32
    %149 = vector.broadcast %cst_61 : f32 to vector<16x1xf32>
    %150 = arith.mulf %148, %149 : vector<16x1xf32>
    %151 = vector.broadcast %150 : vector<16x1xf32> to vector<16x128xf32>
    %152 = arith.subf %146, %151 : vector<16x128xf32>
    %153 = vector.broadcast %0 : vector<1x128xf32> to vector<16x128xf32>
    %154 = arith.mulf %152, %153 : vector<16x128xf32>
    %155 = arith.mulf %154, %154 : vector<16x128xf32>
    %cst_62 = arith.constant dense<0.000000e+00> : vector<16xf32>
    %156 = vector.multi_reduction <add>, %155, %cst_62 [1] : vector<16x128xf32> to vector<16xf32>
    %157 = vector.shape_cast %156 : vector<16xf32> to vector<16x1xf32>
    %cst_63 = arith.constant 3.125000e-02 : f32
    %158 = vector.broadcast %cst_63 : f32 to vector<16x1xf32>
    %159 = arith.mulf %157, %158 : vector<16x1xf32>
    %cst_64 = arith.constant 9.99999974E-6 : f32
    %160 = vector.broadcast %cst_64 : f32 to vector<16x1xf32>
    %161 = arith.addf %159, %160 : vector<16x1xf32>
    %162 = math.rsqrt %161 : vector<16x1xf32>
    %163 = vector.broadcast %162 : vector<16x1xf32> to vector<16x128xf32>
    %164 = arith.mulf %154, %163 : vector<16x128xf32>
    %165 = vector.broadcast %1 : vector<1x128xf32> to vector<16x128xf32>
    %166 = arith.mulf %164, %165 : vector<16x128xf32>
    %167 = vector.broadcast %2 : vector<1x128xf32> to vector<16x128xf32>
    %168 = arith.addf %166, %167 : vector<16x128xf32>
    %169 = arith.truncf %168 : vector<16x128xf32> to vector<16x128xbf16>
    %cst_65 = arith.constant dense<0.000000e+00> : vector<128x128xf32>
    %170 = tpu.matmul %3, %169, %cst_65 {dimension_numbers = #tpu.dot_dimension_numbers<[1], [0], [0], [1], [0, 0, 1, 1], [], []>} : vector<128x16xbf16>, vector<16x128xbf16>, vector<128x128xf32> -> vector<128x128xf32>
    %171 = vector.broadcast %4 : vector<128x1xf32> to vector<128x128xf32>
    %172 = arith.addf %170, %171 : vector<128x128xf32>
    %cst_66 = arith.constant 5.000000e-01 : f32
    %173 = vector.broadcast %cst_66 : f32 to vector<128x128xf32>
    %174 = arith.mulf %173, %172 : vector<128x128xf32>
    %cst_67 = arith.constant 0.707106769 : f32
    %175 = vector.broadcast %cst_67 : f32 to vector<128x128xf32>
    %176 = arith.mulf %172, %175 : vector<128x128xf32>
    %177 = math.erf %176 : vector<128x128xf32>
    %cst_68 = arith.constant 1.000000e+00 : f32
    %178 = vector.broadcast %cst_68 : f32 to vector<128x128xf32>
    %179 = arith.addf %178, %177 : vector<128x128xf32>
    %180 = arith.mulf %174, %179 : vector<128x128xf32>
    %181 = arith.truncf %180 : vector<128x128xf32> to vector<128x128xbf16>
    %cst_69 = arith.constant dense<0.000000e+00> : vector<16x128xf32>
    %182 = tpu.matmul %5, %181, %cst_69 {dimension_numbers = #tpu.dot_dimension_numbers<[1], [0], [0], [1], [0, 0, 1, 1], [], []>} : vector<16x128xbf16>, vector<128x128xbf16>, vector<16x128xf32> -> vector<16x128xf32>
    %183 = vector.broadcast %6 : vector<16x1xf32> to vector<16x128xf32>
    %184 = arith.addf %182, %183 : vector<16x128xf32>
    %185 = vector.broadcast %0 : vector<1x128xf32> to vector<16x128xf32>
    %186 = arith.mulf %184, %185 : vector<16x128xf32>
    %187 = arith.addf %146, %186 : vector<16x128xf32>
    %c3_70 = arith.constant 3 : index
    %c0_71 = arith.constant 0 : index
    %c0_72 = arith.constant 0 : index
    %188 = vector.load %arg15[%c3_70, %c0_71, %c0_72] : memref<4x16x128xf32, #tpu.memory_space<vmem>>, vector<1x16x128xf32>
    %189 = vector.shape_cast %188 : vector<1x16x128xf32> to vector<16x128xf32>
    %190 = vector.shape_cast %187 : vector<16x128xf32> to vector<1x16x128xf32>
    tpu.vector_store %arg15[%c3_70, %c0_71, %c0_72], %190 {strides = array<i32>} : memref<4x16x128xf32, #tpu.memory_space<vmem>>, vector<1x16x128xf32>,
    %c0_73 = arith.constant 0 : index
    %c0_74 = arith.constant 0 : index
    %c0_75 = arith.constant 0 : index
    %191 = vector.load %arg15[%c0_73, %c0_74, %c0_75] : memref<4x16x128xf32, #tpu.memory_space<vmem>>, vector<4x16x128xf32>
    %192 = vector.shape_cast %191 : vector<4x16x128xf32> to vector<64x128xf32>
    %c0_76 = arith.constant 0 : index
    %c0_77 = arith.constant 0 : index
    %193 = vector.load %arg9[%c0_76, %c0_77] : memref<1x128xf32, #tpu.memory_space<vmem>>, vector<1x128xf32>
    %c0_78 = arith.constant 0 : index
    %c0_79 = arith.constant 0 : index
    %194 = vector.load %arg10[%c0_78, %c0_79] : memref<1x128xf32, #tpu.memory_space<vmem>>, vector<1x128xf32>
    %cst_80 = arith.constant dense<0.000000e+00> : vector<64xf32>
    %195 = vector.multi_reduction <add>, %192, %cst_80 [1] : vector<64x128xf32> to vector<64xf32>
    %196 = vector.shape_cast %195 : vector<64xf32> to vector<64x1xf32>
    %cst_81 = arith.constant 3.125000e-02 : f32
    %197 = vector.broadcast %cst_81 : f32 to vector<64x1xf32>
    %198 = arith.mulf %196, %197 : vector<64x1xf32>
    %199 = vector.broadcast %198 : vector<64x1xf32> to vector<64x128xf32>
    %200 = arith.subf %192, %199 : vector<64x128xf32>
    %201 = vector.broadcast %0 : vector<1x128xf32> to vector<64x128xf32>
    %202 = arith.mulf %200, %201 : vector<64x128xf32>
    %203 = arith.mulf %202, %202 : vector<64x128xf32>
    %cst_82 = arith.constant dense<0.000000e+00> : vector<64xf32>
    %204 = vector.multi_reduction <add>, %203, %cst_82 [1] : vector<64x128xf32> to vector<64xf32>
    %205 = vector.shape_cast %204 : vector<64xf32> to vector<64x1xf32>
    %cst_83 = arith.constant 3.125000e-02 : f32
    %206 = vector.broadcast %cst_83 : f32 to vector<64x1xf32>
    %207 = arith.mulf %205, %206 : vector<64x1xf32>
    %cst_84 = arith.constant 9.99999974E-6 : f32
    %208 = vector.broadcast %cst_84 : f32 to vector<64x1xf32>
    %209 = arith.addf %207, %208 : vector<64x1xf32>
    %210 = math.rsqrt %209 : vector<64x1xf32>
    %211 = vector.broadcast %210 : vector<64x1xf32> to vector<64x128xf32>
    %212 = arith.mulf %202, %211 : vector<64x128xf32>
    %213 = vector.broadcast %193 : vector<1x128xf32> to vector<64x128xf32>
    %214 = arith.mulf %212, %213 : vector<64x128xf32>
    %215 = vector.broadcast %194 : vector<1x128xf32> to vector<64x128xf32>
    %216 = arith.addf %214, %215 : vector<64x128xf32>
    %217 = arith.truncf %216 : vector<64x128xf32> to vector<64x128xbf16>
    %c0_85 = arith.constant 0 : index
    %c0_86 = arith.constant 0 : index
    %218 = vector.load %arg11[%c0_85, %c0_86] : memref<128x128xbf16, #tpu.memory_space<vmem>>, vector<128x128xbf16>
    %cst_87 = arith.constant dense<0.000000e+00> : vector<64x128xf32>
    %219 = tpu.matmul %217, %218, %cst_87 {dimension_numbers = #tpu.dot_dimension_numbers<[1], [0], [0], [1], [0, 0, 1, 1], [], []>} : vector<64x128xbf16>, vector<128x128xbf16>, vector<64x128xf32> -> vector<64x128xf32>
    %c0_88 = arith.constant 0 : index
    %c0_89 = arith.constant 0 : index
    %220 = vector.load %arg12[%c0_88, %c0_89] : memref<1x128xf32, #tpu.memory_space<vmem>>, vector<1x128xf32>
    %221 = vector.broadcast %220 : vector<1x128xf32> to vector<64x128xf32>
    %222 = arith.addf %219, %221 : vector<64x128xf32>
    %cst_90 = arith.constant 5.000000e-01 : f32
    %223 = vector.broadcast %cst_90 : f32 to vector<64x128xf32>
    %224 = arith.mulf %223, %222 : vector<64x128xf32>
    %cst_91 = arith.constant 0.707106769 : f32
    %225 = vector.broadcast %cst_91 : f32 to vector<64x128xf32>
    %226 = arith.mulf %222, %225 : vector<64x128xf32>
    %227 = math.erf %226 : vector<64x128xf32>
    %cst_92 = arith.constant 1.000000e+00 : f32
    %228 = vector.broadcast %cst_92 : f32 to vector<64x128xf32>
    %229 = arith.addf %228, %227 : vector<64x128xf32>
    %230 = arith.mulf %224, %229 : vector<64x128xf32>
    %231 = arith.truncf %230 : vector<64x128xf32> to vector<64x128xbf16>
    %c0_93 = arith.constant 0 : index
    %c0_94 = arith.constant 0 : index
    %232 = vector.load %arg13[%c0_93, %c0_94] : memref<128x128xbf16, #tpu.memory_space<vmem>>, vector<128x128xbf16>
    %cst_95 = arith.constant dense<0.000000e+00> : vector<64x128xf32>
    %233 = tpu.matmul %231, %232, %cst_95 {dimension_numbers = #tpu.dot_dimension_numbers<[1], [0], [0], [1], [0, 0, 1, 1], [], []>} : vector<64x128xbf16>, vector<128x128xbf16>, vector<64x128xf32> -> vector<64x128xf32>
    %c0_96 = arith.constant 0 : index
    %c0_97 = arith.constant 0 : index
    %234 = vector.load %arg14[%c0_96, %c0_97] : memref<1x128xf32, #tpu.memory_space<vmem>>, vector<1x128xf32>
    %235 = vector.broadcast %234 : vector<1x128xf32> to vector<64x128xf32>
    %236 = arith.addf %233, %235 : vector<64x128xf32>
    %237 = arith.addf %192, %236 : vector<64x128xf32>
    %238 = vector.shape_cast %237 : vector<64x128xf32> to vector<4x16x128xf32>
    %c0_98 = arith.constant 0 : index
    %c0_99 = arith.constant 0 : index
    %c0_100 = arith.constant 0 : index
    %239 = vector.load %arg15[%c0_98, %c0_99, %c0_100] : memref<4x16x128xf32, #tpu.memory_space<vmem>>, vector<4x16x128xf32>
    tpu.vector_store %arg15[%c0_98, %c0_99, %c0_100], %238 {strides = array<i32>} : memref<4x16x128xf32, #tpu.memory_space<vmem>>, vector<4x16x128xf32>,
    return
  }
  func.func @transform_0(%arg0: i32) -> (i32, i32, i32) {
    %c0_i32 = arith.constant 0 : i32
    %c0_i32_0 = arith.constant 0 : i32
    %c0_i32_1 = arith.constant 0 : i32
    return %arg0, %c0_i32, %c0_i32_0 : i32, i32, i32
  }
  func.func @transform_1(%arg0: i32) -> (i32, i32) {
    %c0_i32 = arith.constant 0 : i32
    %c0_i32_0 = arith.constant 0 : i32
    %c0_i32_1 = arith.constant 0 : i32
    return %c0_i32, %c0_i32_0 : i32, i32
  }
  func.func @transform_2(%arg0: i32) -> (i32, i32) {
    %c0_i32 = arith.constant 0 : i32
    %c0_i32_0 = arith.constant 0 : i32
    %c0_i32_1 = arith.constant 0 : i32
    return %c0_i32, %c0_i32_0 : i32, i32
  }
  func.func @transform_3(%arg0: i32) -> (i32, i32) {
    %c0_i32 = arith.constant 0 : i32
    %c0_i32_0 = arith.constant 0 : i32
    %c0_i32_1 = arith.constant 0 : i32
    return %c0_i32, %c0_i32_0 : i32, i32
  }
  func.func @transform_4(%arg0: i32) -> (i32, i32) {
    %c0_i32 = arith.constant 0 : i32
    %c0_i32_0 = arith.constant 0 : i32
    %c0_i32_1 = arith.constant 0 : i32
    return %c0_i32, %c0_i32_0 : i32, i32
  }
  func.func @transform_5(%arg0: i32) -> (i32, i32) {
    %c0_i32 = arith.constant 0 : i32
    %c0_i32_0 = arith.constant 0 : i32
    %c0_i32_1 = arith.constant 0 : i32
    return %c0_i32, %c0_i32_0 : i32, i32
  }
  func.func @transform_6(%arg0: i32) -> (i32, i32) {
    %c0_i32 = arith.constant 0 : i32
    %c0_i32_0 = arith.constant 0 : i32
    %c0_i32_1 = arith.constant 0 : i32
    return %c0_i32, %c0_i32_0 : i32, i32
  }
  func.func @transform_7(%arg0: i32) -> (i32, i32) {
    %c0_i32 = arith.constant 0 : i32
    %c0_i32_0 = arith.constant 0 : i32
    %c0_i32_1 = arith.constant 0 : i32
    return %c0_i32, %c0_i32_0 : i32, i32
  }
  func.func @transform_8(%arg0: i32) -> (i32, i32) {
    %c0_i32 = arith.constant 0 : i32
    %c0_i32_0 = arith.constant 0 : i32
    %c0_i32_1 = arith.constant 0 : i32
    return %c0_i32, %c0_i32_0 : i32, i32
  }
  func.func @transform_9(%arg0: i32) -> (i32, i32) {
    %c0_i32 = arith.constant 0 : i32
    %c0_i32_0 = arith.constant 0 : i32
    %c0_i32_1 = arith.constant 0 : i32
    return %c0_i32, %c0_i32_0 : i32, i32
  }
  func.func @transform_10(%arg0: i32) -> (i32, i32) {
    %c0_i32 = arith.constant 0 : i32
    %c0_i32_0 = arith.constant 0 : i32
    %c0_i32_1 = arith.constant 0 : i32
    return %c0_i32, %c0_i32_0 : i32, i32
  }
  func.func @transform_11(%arg0: i32) -> (i32, i32) {
    %c0_i32 = arith.constant 0 : i32
    %c0_i32_0 = arith.constant 0 : i32
    %c0_i32_1 = arith.constant 0 : i32
    return %c0_i32, %c0_i32_0 : i32, i32
  }
  func.func @transform_12(%arg0: i32) -> (i32, i32) {
    %c0_i32 = arith.constant 0 : i32
    %c0_i32_0 = arith.constant 0 : i32
    %c0_i32_1 = arith.constant 0 : i32
    return %c0_i32, %c0_i32_0 : i32, i32
  }
  func.func @transform_13(%arg0: i32) -> (i32, i32) {
    %c0_i32 = arith.constant 0 : i32
    %c0_i32_0 = arith.constant 0 : i32
    %c0_i32_1 = arith.constant 0 : i32
    return %c0_i32, %c0_i32_0 : i32, i32
  }
  func.func @transform_14(%arg0: i32) -> (i32, i32, i32) {
    %c0_i32 = arith.constant 0 : i32
    %c0_i32_0 = arith.constant 0 : i32
    %c0_i32_1 = arith.constant 0 : i32
    return %arg0, %c0_i32, %c0_i32_0 : i32, i32, i32
  }
}

</mosaic_0001>

<llo_original>
// kernel: tpu_custom_call.1
$region0: #{tpu_custom_call.1}
  #allocation0 [shape = 'u32[]', space=smem, size = 0x4, offset = 0x4, fixed_abs, tag = 'smem constant byte address 0x4 - core index']
  #allocation1 [shape = 'u32[144,128]{1,0:T(1,128)}', space=vmem, size = 0x12000, scoped, tag = 'internal scratch']
  %s0 = inlined_call_operand.vmem [shape: f32[8,16,128], index: 0, kind: input, shape index: {}]
  %s1 = inlined_call_operand.vmem [shape: f32[1,128], index: 1, kind: input, shape index: {}]
  %s2 = inlined_call_operand.vmem [shape: f32[1,128], index: 2, kind: input, shape index: {}]
  %s3 = inlined_call_operand.hbm [shape: f32[1,128], index: 3, kind: input, shape index: {}]
  %s4 = inlined_call_operand.vmem [shape: bf16[128,16], index: 4, kind: input, shape index: {}]
  %s5 = inlined_call_operand.vmem [shape: f32[128,1], index: 5, kind: input, shape index: {}]
  %s6 = inlined_call_operand.hbm [shape: bf16[16,128], index: 6, kind: input, shape index: {}]
  %s7 = inlined_call_operand.vmem [shape: f32[16,1], index: 7, kind: input, shape index: {}]
  %s8 = inlined_call_operand.hbm [shape: f32[1,128], index: 8, kind: input, shape index: {}]
  %s9 = inlined_call_operand.hbm [shape: f32[1,128], index: 9, kind: input, shape index: {}]
  %s10 = inlined_call_operand.vmem [shape: bf16[128,128], index: 10, kind: input, shape index: {}]
  %s11 = inlined_call_operand.hbm [shape: f32[1,128], index: 11, kind: input, shape index: {}]
  %s12 = inlined_call_operand.vmem [shape: bf16[128,128], index: 12, kind: input, shape index: {}]
  %s13 = inlined_call_operand.vmem [shape: f32[1,128], index: 13, kind: input, shape index: {}]
  %s14 = inlined_call_operand.hbm [shape: f32[8,16,128], index: 14, kind: output, shape index: {}]
  %s15 = sld [smem:[#allocation0]]
  $region109: #{tpu_custom_call.1} parent=0
    _
  %s17 = ssub.s32 1, %s15
  %s18 = scalar_select 0, %s17, %s15
  $region1: #{tpu_custom_call.1} parent=0
    #allocation2 [shape = 'u8[512]{0}', space=vmem, size = 0x400, scoped, tag = 'input window, operand 3, single buffered']
    #allocation3 [shape = 's32[2]{0}', space=sflag, size = 0x8, scoped, tag = 'scoped memory for tpu_custom_call.1']
    #allocation4 [shape = 's32[2]{0}', space=sflag, size = 0x8, scoped, tag = 'scoped memory for tpu_custom_call.1']
    #allocation5 [shape = 'u8[4096]{0}', space=vmem, size = 0x1000, scoped, tag = 'input window, operand 6, single buffered']
    #allocation6 [shape = 's32[1]{0}', space=sflag, size = 0x4, scoped, tag = 'scoped memory for tpu_custom_call.1']
    #allocation7 [shape = 'u8[512]{0}', space=vmem, size = 0x400, scoped, tag = 'input window, operand 8, single buffered']
    #allocation8 [shape = 'u8[512]{0}', space=vmem, size = 0x400, scoped, tag = 'input window, operand 9, single buffered']
    #allocation9 [shape = 's32[1]{0}', space=sflag, size = 0x4, scoped, tag = 'scoped memory for tpu_custom_call.1']
    #allocation10 [shape = 'u8[512]{0}', space=vmem, size = 0x400, scoped, tag = 'input window, operand 11, single buffered']
    #allocation11 [shape = 'u8[65536]{0}', space=vmem, size = 0x10000, scoped, tag = 'output window, operand 0']
    %19 = vsyncpa [#allocation3], 0
    %20 = vsyncpa [#allocation6], 0
    %21 = vsyncpa [#allocation9], 0
    %22 = vsyncpa [#allocation4], 0
    %s23 = scalar_lea.sflag [#allocation4], 1
    %24 = vsyncpa %s23, 0
    loop: start=0, step=1, limit=4
    $region2: #{tpu_custom_call.1} parent=1 // loop_pre_header
      _
    $region3: #{tpu_custom_call.1} parent=1 // loop_header
      %s26 = sphi 0, %s30
      %p27 = scmp.ge.s32.totalorder %s26, 4
      %s36 = sphi 0, %s38
      %s39 = sphi 0, %s36
      %s40 = sphi 0, %s39
      %s56 = sphi 0, %s40
      %s60 = sphi 0, %s60
      %s62 = sphi 0, %s60
      %s63 = sphi 0, %s62
      %s77 = sphi 0, %s63
      %s81 = sphi 0, %s81
      %s83 = sphi 0, %s81
      %s84 = sphi 0, %s83
      %s98 = sphi 0, %s84
      %s102 = sphi 0, %s102
      %s104 = sphi 0, %s102
      %s105 = sphi 0, %s104
      %s119 = sphi 0, %s105
      %s123 = sphi 0, %s123
      %s125 = sphi 0, %s123
      %s126 = sphi 0, %s125
      %s140 = sphi 0, %s126
      %s144 = sphi 0, %s144
      %s146 = sphi 0, %s144
      %s147 = sphi 0, %s146
      %s161 = sphi 0, %s147
      %s165 = sphi 0, %s165
      %s167 = sphi 0, %s165
      %s168 = sphi 0, %s167
      %s182 = sphi 0, %s168
      %s186 = sphi 0, %s186
      %s188 = sphi 0, %s186
      %s189 = sphi 0, %s188
      %s203 = sphi 0, %s189
      %s207 = sphi 0, %s207
      %s209 = sphi 0, %s207
      %s210 = sphi 0, %s209
      %s224 = sphi 0, %s210
      %s228 = sphi 0, %s228
      %s230 = sphi 0, %s228
      %s231 = sphi 0, %s230
      %s245 = sphi 0, %s231
      %s249 = sphi 0, %s249
      %s251 = sphi 0, %s249
      %s252 = sphi 0, %s251
      %s266 = sphi 0, %s252
      %s270 = sphi 0, %s270
      %s272 = sphi 0, %s270
      %s273 = sphi 0, %s272
      %s287 = sphi 0, %s273
      %s291 = sphi 0, %s291
      %s293 = sphi 0, %s291
      %s294 = sphi 0, %s293
      %s308 = sphi 0, %s294
      %s312 = sphi 0, %s312
      %s314 = sphi 0, %s312
      %s315 = sphi 0, %s314
      %s329 = sphi 0, %s315
      %s335 = sphi 0, %s337
      %s338 = sphi 0, %s335
      %s339 = sphi 0, %s338
      %s355 = sphi 0, %s339
    $region4: #{tpu_custom_call.1} parent=1 // loop_header_branch
      %29 = sbr.rel (%p27) target = $region8
    $region5: #{tpu_custom_call.1} parent=1 // loop_body
      %s31 = ssub.s32 %s26, 1
      %s32 = ssub.s32 %s26, 2
      %s33 = sadd.s32 %s26, 1
      %s34 = ssub.s32 %s26, %s33
      %p35 = scmp.eq.s32.totalorder %s34, 0
      %s37 = sadd.s32 %s36, 1
      %s38 = scalar_select %p35, %s36, %s37
      %p41 = pneg %p35
      %p42 = scmp.eq.s32.totalorder %s26, 1
      %p43 = por %p41, %p42
      %p44 = scmp.ne.s32.totalorder %s36, %s39
      %p45 = scmp.eq.s32.totalorder %s26, 0
      %p46 = por %p44, %p45
      %p47 = scmp.ne.s32.totalorder %s36, %s39
      %p48 = scmp.eq.s32.totalorder %s31, 1
      %p49 = por %p47, %p48
      %p50 = scmp.ne.s32.totalorder %s39, %s40
      %p51 = scmp.eq.s32.totalorder %s31, 0
      %p52 = por %p50, %p51
      %p53 = scmp.ne.s32.totalorder %s39, %s40
      %p54 = scmp.eq.s32.totalorder %s32, 1
      %p55 = por %p53, %p54
      %p57 = scmp.ne.s32.totalorder %s40, %s56
      %p58 = scmp.eq.s32.totalorder %s32, 0
      %p59 = por %p57, %p58
      %s61 = sadd.s32 %s60, 1
      %p64 = scmp.eq.s32.totalorder %s26, 1
      %p65 = scmp.ne.s32.totalorder %s60, %s62
      %p66 = scmp.eq.s32.totalorder %s26, 0
      %p67 = por %p65, %p66
      %p68 = scmp.ne.s32.totalorder %s60, %s62
      %p69 = scmp.eq.s32.totalorder %s31, 1
      %p70 = por %p68, %p69
      %p71 = scmp.ne.s32.totalorder %s62, %s63
      %p72 = scmp.eq.s32.totalorder %s31, 0
      %p73 = por %p71, %p72
      %p74 = scmp.ne.s32.totalorder %s62, %s63
      %p75 = scmp.eq.s32.totalorder %s32, 1
      %p76 = por %p74, %p75
      %p78 = scmp.ne.s32.totalorder %s63, %s77
      %p79 = scmp.eq.s32.totalorder %s32, 0
      %p80 = por %p78, %p79
      %s82 = sadd.s32 %s81, 1
      %p85 = scmp.eq.s32.totalorder %s26, 1
      %p86 = scmp.ne.s32.totalorder %s81, %s83
      %p87 = scmp.eq.s32.totalorder %s26, 0
      %p88 = por %p86, %p87
      %p89 = scmp.ne.s32.totalorder %s81, %s83
      %p90 = scmp.eq.s32.totalorder %s31, 1
      %p91 = por %p89, %p90
      %p92 = scmp.ne.s32.totalorder %s83, %s84
      %p93 = scmp.eq.s32.totalorder %s31, 0
      %p94 = por %p92, %p93
      %p95 = scmp.ne.s32.totalorder %s83, %s84
      %p96 = scmp.eq.s32.totalorder %s32, 1
      %p97 = por %p95, %p96
      %p99 = scmp.ne.s32.totalorder %s84, %s98
      %p100 = scmp.eq.s32.totalorder %s32, 0
      %p101 = por %p99, %p100
      %s103 = sadd.s32 %s102, 1
      %p106 = scmp.eq.s32.totalorder %s26, 1
      %p107 = scmp.ne.s32.totalorder %s102, %s104
      %p108 = scmp.eq.s32.totalorder %s26, 0
      %p109 = por %p107, %p108
      %p110 = scmp.ne.s32.totalorder %s102, %s104
      %p111 = scmp.eq.s32.totalorder %s31, 1
      %p112 = por %p110, %p111
      %p113 = scmp.ne.s32.totalorder %s104, %s105
      %p114 = scmp.eq.s32.totalorder %s31, 0
      %p115 = por %p113, %p114
      %p116 = scmp.ne.s32.totalorder %s104, %s105
      %p117 = scmp.eq.s32.totalorder %s32, 1
      %p118 = por %p116, %p117
      %p120 = scmp.ne.s32.totalorder %s105, %s119
      %p121 = scmp.eq.s32.totalorder %s32, 0
      %p122 = por %p120, %p121
      %s124 = sadd.s32 %s123, 1
      %p127 = scmp.eq.s32.totalorder %s26, 1
      %p128 = scmp.ne.s32.totalorder %s123, %s125
      %p129 = scmp.eq.s32.totalorder %s26, 0
      %p130 = por %p128, %p129
      %p131 = scmp.ne.s32.totalorder %s123, %s125
      %p132 = scmp.eq.s32.totalorder %s31, 1
      %p133 = por %p131, %p132
      %p134 = scmp.ne.s32.totalorder %s125, %s126
      %p135 = scmp.eq.s32.totalorder %s31, 0
      %p136 = por %p134, %p135
      %p137 = scmp.ne.s32.totalorder %s125, %s126
      %p138 = scmp.eq.s32.totalorder %s32, 1
      %p139 = por %p137, %p138
      %p141 = scmp.ne.s32.totalorder %s126, %s140
      %p142 = scmp.eq.s32.totalorder %s32, 0
      %p143 = por %p141, %p142
      %s145 = sadd.s32 %s144, 1
      %p148 = scmp.eq.s32.totalorder %s26, 1
      %p149 = scmp.ne.s32.totalorder %s144, %s146
      %p150 = scmp.eq.s32.totalorder %s26, 0
      %p151 = por %p149, %p150
      %p152 = scmp.ne.s32.totalorder %s144, %s146
      %p153 = scmp.eq.s32.totalorder %s31, 1
      %p154 = por %p152, %p153
      %p155 = scmp.ne.s32.totalorder %s146, %s147
      %p156 = scmp.eq.s32.totalorder %s31, 0
      %p157 = por %p155, %p156
      %p158 = scmp.ne.s32.totalorder %s146, %s147
      %p159 = scmp.eq.s32.totalorder %s32, 1
      %p160 = por %p158, %p159
      %p162 = scmp.ne.s32.totalorder %s147, %s161
      %p163 = scmp.eq.s32.totalorder %s32, 0
      %p164 = por %p162, %p163
      %s166 = sadd.s32 %s165, 1
      %p169 = scmp.eq.s32.totalorder %s26, 1
      %p170 = scmp.ne.s32.totalorder %s165, %s167
      %p171 = scmp.eq.s32.totalorder %s26, 0
      %p172 = por %p170, %p171
      %p173 = scmp.ne.s32.totalorder %s165, %s167
      %p174 = scmp.eq.s32.totalorder %s31, 1
      %p175 = por %p173, %p174
      %p176 = scmp.ne.s32.totalorder %s167, %s168
      %p177 = scmp.eq.s32.totalorder %s31, 0
      %p178 = por %p176, %p177
      %p179 = scmp.ne.s32.totalorder %s167, %s168
      %p180 = scmp.eq.s32.totalorder %s32, 1
      %p181 = por %p179, %p180
      %p183 = scmp.ne.s32.totalorder %s168, %s182
      %p184 = scmp.eq.s32.totalorder %s32, 0
      %p185 = por %p183, %p184
      %s187 = sadd.s32 %s186, 1
      %p190 = scmp.eq.s32.totalorder %s26, 1
      %p191 = scmp.ne.s32.totalorder %s186, %s188
      %p192 = scmp.eq.s32.totalorder %s26, 0
      %p193 = por %p191, %p192
      %p194 = scmp.ne.s32.totalorder %s186, %s188
      %p195 = scmp.eq.s32.totalorder %s31, 1
      %p196 = por %p194, %p195
      %p197 = scmp.ne.s32.totalorder %s188, %s189
      %p198 = scmp.eq.s32.totalorder %s31, 0
      %p199 = por %p197, %p198
      %p200 = scmp.ne.s32.totalorder %s188, %s189
      %p201 = scmp.eq.s32.totalorder %s32, 1
      %p202 = por %p200, %p201
      %p204 = scmp.ne.s32.totalorder %s189, %s203
      %p205 = scmp.eq.s32.totalorder %s32, 0
      %p206 = por %p204, %p205
      %s208 = sadd.s32 %s207, 1
      %p211 = scmp.eq.s32.totalorder %s26, 1
      %p212 = scmp.ne.s32.totalorder %s207, %s209
      %p213 = scmp.eq.s32.totalorder %s26, 0
      %p214 = por %p212, %p213
      %p215 = scmp.ne.s32.totalorder %s207, %s209
      %p216 = scmp.eq.s32.totalorder %s31, 1
      %p217 = por %p215, %p216
      %p218 = scmp.ne.s32.totalorder %s209, %s210
      %p219 = scmp.eq.s32.totalorder %s31, 0
      %p220 = por %p218, %p219
      %p221 = scmp.ne.s32.totalorder %s209, %s210
      %p222 = scmp.eq.s32.totalorder %s32, 1
      %p223 = por %p221, %p222
      %p225 = scmp.ne.s32.totalorder %s210, %s224
      %p226 = scmp.eq.s32.totalorder %s32, 0
      %p227 = por %p225, %p226
      %s229 = sadd.s32 %s228, 1
      %p232 = scmp.eq.s32.totalorder %s26, 1
      %p233 = scmp.ne.s32.totalorder %s228, %s230
      %p234 = scmp.eq.s32.totalorder %s26, 0
      %p235 = por %p233, %p234
      %p236 = scmp.ne.s32.totalorder %s228, %s230
      %p237 = scmp.eq.s32.totalorder %s31, 1
      %p238 = por %p236, %p237
      %p239 = scmp.ne.s32.totalorder %s230, %s231
      %p240 = scmp.eq.s32.totalorder %s31, 0
      %p241 = por %p239, %p240
      %p242 = scmp.ne.s32.totalorder %s230, %s231
      %p243 = scmp.eq.s32.totalorder %s32, 1
      %p244 = por %p242, %p243
      %p246 = scmp.ne.s32.totalorder %s231, %s245
      %p247 = scmp.eq.s32.totalorder %s32, 0
      %p248 = por %p246, %p247
      %s250 = sadd.s32 %s249, 1
      %p253 = scmp.eq.s32.totalorder %s26, 1
      %p254 = scmp.ne.s32.totalorder %s249, %s251
      %p255 = scmp.eq.s32.totalorder %s26, 0
      %p256 = por %p254, %p255
      %p257 = scmp.ne.s32.totalorder %s249, %s251
      %p258 = scmp.eq.s32.totalorder %s31, 1
      %p259 = por %p257, %p258
      %p260 = scmp.ne.s32.totalorder %s251, %s252
      %p261 = scmp.eq.s32.totalorder %s31, 0
      %p262 = por %p260, %p261
      %p263 = scmp.ne.s32.totalorder %s251, %s252
      %p264 = scmp.eq.s32.totalorder %s32, 1
      %p265 = por %p263, %p264
      %p267 = scmp.ne.s32.totalorder %s252, %s266
      %p268 = scmp.eq.s32.totalorder %s32, 0
      %p269 = por %p267, %p268
      %s271 = sadd.s32 %s270, 1
      %p274 = scmp.eq.s32.totalorder %s26, 1
      %p275 = scmp.ne.s32.totalorder %s270, %s272
      %p276 = scmp.eq.s32.totalorder %s26, 0
      %p277 = por %p275, %p276
      %p278 = scmp.ne.s32.totalorder %s270, %s272
      %p279 = scmp.eq.s32.totalorder %s31, 1
      %p280 = por %p278, %p279
      %p281 = scmp.ne.s32.totalorder %s272, %s273
      %p282 = scmp.eq.s32.totalorder %s31, 0
      %p283 = por %p281, %p282
      %p284 = scmp.ne.s32.totalorder %s272, %s273
      %p285 = scmp.eq.s32.totalorder %s32, 1
      %p286 = por %p284, %p285
      %p288 = scmp.ne.s32.totalorder %s273, %s287
      %p289 = scmp.eq.s32.totalorder %s32, 0
      %p290 = por %p288, %p289
      %s292 = sadd.s32 %s291, 1
      %p295 = scmp.eq.s32.totalorder %s26, 1
      %p296 = scmp.ne.s32.totalorder %s291, %s293
      %p297 = scmp.eq.s32.totalorder %s26, 0
      %p298 = por %p296, %p297
      %p299 = scmp.ne.s32.totalorder %s291, %s293
      %p300 = scmp.eq.s32.totalorder %s31, 1
      %p301 = por %p299, %p300
      %p302 = scmp.ne.s32.totalorder %s293, %s294
      %p303 = scmp.eq.s32.totalorder %s31, 0
      %p304 = por %p302, %p303
      %p305 = scmp.ne.s32.totalorder %s293, %s294
      %p306 = scmp.eq.s32.totalorder %s32, 1
      %p307 = por %p305, %p306
      %p309 = scmp.ne.s32.totalorder %s294, %s308
      %p310 = scmp.eq.s32.totalorder %s32, 0
      %p311 = por %p309, %p310
      %s313 = sadd.s32 %s312, 1
      %p316 = scmp.eq.s32.totalorder %s26, 1
      %p317 = scmp.ne.s32.totalorder %s312, %s314
      %p318 = scmp.eq.s32.totalorder %s26, 0
      %p319 = por %p317, %p318
      %p320 = scmp.ne.s32.totalorder %s312, %s314
      %p321 = scmp.eq.s32.totalorder %s31, 1
      %p322 = por %p320, %p321
      %p323 = scmp.ne.s32.totalorder %s314, %s315
      %p324 = scmp.eq.s32.totalorder %s31, 0
      %p325 = por %p323, %p324
      %p326 = scmp.ne.s32.totalorder %s314, %s315
      %p327 = scmp.eq.s32.totalorder %s32, 1
      %p328 = por %p326, %p327
      %p330 = scmp.ne.s32.totalorder %s315, %s329
      %p331 = scmp.eq.s32.totalorder %s32, 0
      %p332 = por %p330, %p331
      %s333 = ssub.s32 %s26, %s33
      %p334 = scmp.eq.s32.totalorder %s333, 0
      %s336 = sadd.s32 %s335, 1
      %s337 = scalar_select %p334, %s335, %s336
      %p340 = pneg %p334
      %p341 = scmp.eq.s32.totalorder %s26, 1
      %p342 = por %p340, %p341
      %p343 = scmp.ne.s32.totalorder %s335, %s338
      %p344 = scmp.eq.s32.totalorder %s26, 0
      %p345 = por %p343, %p344
      %p346 = scmp.ne.s32.totalorder %s335, %s338
      %p347 = scmp.eq.s32.totalorder %s31, 1
      %p348 = por %p346, %p347
      %p349 = scmp.ne.s32.totalorder %s338, %s339
      %p350 = scmp.eq.s32.totalorder %s31, 0
      %p351 = por %p349, %p350
      %p352 = scmp.ne.s32.totalorder %s338, %s339
      %p353 = scmp.eq.s32.totalorder %s32, 1
      %p354 = por %p352, %p353
      %p356 = scmp.ne.s32.totalorder %s339, %s355
      %p357 = scmp.eq.s32.totalorder %s32, 0
      %p358 = por %p356, %p357
      %p359 = scmp.le.s32.totalorder 1, %s26
      %p360 = scmp.lt.s32.totalorder %s26, 3
      %p361 = pnand %p359, %p360
      %p362 = pneg %p361
      // Predicated region
      $region9: #{tpu_custom_call.1} parent=5 // pred_check
        _
      $region10: #{tpu_custom_call.1} parent=5 // pred_check_branch
        %364 = sbr.rel (%p361) target = $region12
      $region11: #{tpu_custom_call.1} parent=5 // pred_region
        %s365 = ssub.s32 %s26, 1
        // Predicated region
        $region13: #{tpu_custom_call.1} parent=11 // pred_check
          %p366 = pneg %p73
        $region14: #{tpu_custom_call.1} parent=11 // pred_check_branch
          %368 = sbr.rel (%p366) target = $region16
        $region15: #{tpu_custom_call.1} parent=11 // pred_region
          _
        $region16: #{tpu_custom_call.1} parent=11 // pred_fallthru
          _
        // Predicated region
        $region17: #{tpu_custom_call.1} parent=11 // pred_check
          %p369 = pneg %p94
        $region18: #{tpu_custom_call.1} parent=11 // pred_check_branch
          %371 = sbr.rel (%p369) target = $region20
        $region19: #{tpu_custom_call.1} parent=11 // pred_region
          _
        $region20: #{tpu_custom_call.1} parent=11 // pred_fallthru
          _
        // Predicated region
        $region21: #{tpu_custom_call.1} parent=11 // pred_check
          %p372 = pneg %p115
        $region22: #{tpu_custom_call.1} parent=11 // pred_check_branch
          %374 = sbr.rel (%p372) target = $region24
        $region23: #{tpu_custom_call.1} parent=11 // pred_region
          %s376 = ssub.s32 16, 16
          %377 = vsyncadd [#allocation3], %s376
          %s379 = sshll.u32 [#allocation2], 4
          %s380 = int_to_ptr.vmem [resolvable:$true] %s379
          %382 = dma.hbm_to_vmem [thread:$0]  %s3, 16, %s380, [#allocation3]
        $region24: #{tpu_custom_call.1} parent=11 // pred_fallthru
          _
        // Predicated region
        $region25: #{tpu_custom_call.1} parent=11 // pred_check
          %p383 = pneg %p136
        $region26: #{tpu_custom_call.1} parent=11 // pred_check_branch
          %385 = sbr.rel (%p383) target = $region28
        $region27: #{tpu_custom_call.1} parent=11 // pred_region
          _
        $region28: #{tpu_custom_call.1} parent=11 // pred_fallthru
          _
        // Predicated region
        $region29: #{tpu_custom_call.1} parent=11 // pred_check
          %p386 = pneg %p157
        $region30: #{tpu_custom_call.1} parent=11 // pred_check_branch
          %388 = sbr.rel (%p386) target = $region32
        $region31: #{tpu_custom_call.1} parent=11 // pred_region
          _
        $region32: #{tpu_custom_call.1} parent=11 // pred_fallthru
          _
        // Predicated region
        $region33: #{tpu_custom_call.1} parent=11 // pred_check
          %p389 = pneg %p178
        $region34: #{tpu_custom_call.1} parent=11 // pred_check_branch
          %391 = sbr.rel (%p389) target = $region36
        $region35: #{tpu_custom_call.1} parent=11 // pred_region
          %s393 = ssub.s32 128, 128
          %394 = vsyncadd [#allocation6], %s393
          %s395 = sshll.u32 [#allocation5], 4
          %s396 = int_to_ptr.vmem [resolvable:$true] %s395
          %401 = dma.hbm_to_vmem [thread:$0]  %s6, 128, %s396, [#allocation6], 64, 64, 4
        $region36: #{tpu_custom_call.1} parent=11 // pred_fallthru
          _
        // Predicated region
        $region37: #{tpu_custom_call.1} parent=11 // pred_check
          %p402 = pneg %p199
        $region38: #{tpu_custom_call.1} parent=11 // pred_check_branch
          %404 = sbr.rel (%p402) target = $region40
        $region39: #{tpu_custom_call.1} parent=11 // pred_region
          _
        $region40: #{tpu_custom_call.1} parent=11 // pred_fallthru
          _
        // Predicated region
        $region41: #{tpu_custom_call.1} parent=11 // pred_check
          %p405 = pneg %p220
        $region42: #{tpu_custom_call.1} parent=11 // pred_check_branch
          %407 = sbr.rel (%p405) target = $region44
        $region43: #{tpu_custom_call.1} parent=11 // pred_region
          %s409 = ssub.s32 16, 16
          %410 = vsyncadd [#allocation6], %s409
          %s412 = sshll.u32 [#allocation7], 4
          %s413 = int_to_ptr.vmem [resolvable:$true] %s412
          %415 = dma.hbm_to_vmem [thread:$0]  %s8, 16, %s413, [#allocation6]
        $region44: #{tpu_custom_call.1} parent=11 // pred_fallthru
          _
        // Predicated region
        $region45: #{tpu_custom_call.1} parent=11 // pred_check
          %p416 = pneg %p241
        $region46: #{tpu_custom_call.1} parent=11 // pred_check_branch
          %418 = sbr.rel (%p416) target = $region48
        $region47: #{tpu_custom_call.1} parent=11 // pred_region
          %s420 = ssub.s32 16, 16
          %421 = vsyncadd [#allocation9], %s420
          %s423 = sshll.u32 [#allocation8], 4
          %s424 = int_to_ptr.vmem [resolvable:$true] %s423
          %426 = dma.hbm_to_vmem [thread:$0]  %s9, 16, %s424, [#allocation9]
        $region48: #{tpu_custom_call.1} parent=11 // pred_fallthru
          _
        // Predicated region
        $region49: #{tpu_custom_call.1} parent=11 // pred_check
          %p427 = pneg %p262
        $region50: #{tpu_custom_call.1} parent=11 // pred_check_branch
          %429 = sbr.rel (%p427) target = $region52
        $region51: #{tpu_custom_call.1} parent=11 // pred_region
          _
        $region52: #{tpu_custom_call.1} parent=11 // pred_fallthru
          _
        // Predicated region
        $region53: #{tpu_custom_call.1} parent=11 // pred_check
          %p430 = pneg %p283
        $region54: #{tpu_custom_call.1} parent=11 // pred_check_branch
          %432 = sbr.rel (%p430) target = $region56
        $region55: #{tpu_custom_call.1} parent=11 // pred_region
          %s434 = ssub.s32 16, 16
          %435 = vsyncadd [#allocation9], %s434
          %s437 = sshll.u32 [#allocation10], 4
          %s438 = int_to_ptr.vmem [resolvable:$true] %s437
          %440 = dma.hbm_to_vmem [thread:$0]  %s11, 16, %s438, [#allocation9]
        $region56: #{tpu_custom_call.1} parent=11 // pred_fallthru
          _
        // Predicated region
        $region57: #{tpu_custom_call.1} parent=11 // pred_check
          %p441 = pneg %p304
        $region58: #{tpu_custom_call.1} parent=11 // pred_check_branch
          %443 = sbr.rel (%p441) target = $region60
        $region59: #{tpu_custom_call.1} parent=11 // pred_region
          _
        $region60: #{tpu_custom_call.1} parent=11 // pred_fallthru
          _
        // Predicated region
        $region61: #{tpu_custom_call.1} parent=11 // pred_check
          %p444 = pneg %p325
        $region62: #{tpu_custom_call.1} parent=11 // pred_check_branch
          %446 = sbr.rel (%p444) target = $region64
        $region63: #{tpu_custom_call.1} parent=11 // pred_region
          _
        $region64: #{tpu_custom_call.1} parent=11 // pred_fallthru
          _
      $region12: #{tpu_custom_call.1} parent=5 // pred_fallthru
        _
      %p447 = scmp.lt.s32.totalorder %s26, 2
      // Predicated region
      $region65: #{tpu_custom_call.1} parent=5 // pred_check
        %p448 = pneg %p447
      $region66: #{tpu_custom_call.1} parent=5 // pred_check_branch
        %450 = sbr.rel (%p448) target = $region68
      $region67: #{tpu_custom_call.1} parent=5 // pred_region
        // Predicated region
        $region69: #{tpu_custom_call.1} parent=67 // pred_check
          %p451 = pneg %p46
        $region70: #{tpu_custom_call.1} parent=67 // pred_check_branch
          %453 = sbr.rel (%p451) target = $region72
        $region71: #{tpu_custom_call.1} parent=67 // pred_region
          %s454 = smul.u32 4, %s26
          %p455 = scmp.lt.s32.totalorder %s454, 7
          %s456 = scalar_select %p455, %s454, 7
          %s457 = smul.addr %s456, 2
          %s458 = smul.addr %s457, 8
          %s459 = scalar_lea.vmem %s0, %s458
          %s460 = smul.u32 4, %s26
        $region72: #{tpu_custom_call.1} parent=67 // pred_fallthru
          _
      $region68: #{tpu_custom_call.1} parent=5 // pred_fallthru
        _
      %p461 = scmp.le.s32.totalorder 1, %s26
      %p462 = scmp.lt.s32.totalorder %s26, 3
      %p463 = pnand %p461, %p462
      %p464 = pneg %p463
      // Predicated region
      $region73: #{tpu_custom_call.1} parent=5 // pred_check
        _
      $region74: #{tpu_custom_call.1} parent=5 // pred_check_branch
        %466 = sbr.rel (%p463) target = $region76
      $region75: #{tpu_custom_call.1} parent=5 // pred_region
        %s467 = ssub.s32 %s26, 1
        // Predicated region
        $region77: #{tpu_custom_call.1} parent=75 // pred_check
          %p468 = pneg %p115
        $region78: #{tpu_custom_call.1} parent=75 // pred_check_branch
          %470 = sbr.rel (%p468) target = $region80
        $region79: #{tpu_custom_call.1} parent=75 // pred_region
          %471 = dma.done [#allocation3], 16
        $region80: #{tpu_custom_call.1} parent=75 // pred_fallthru
          _
        // Predicated region
        $region81: #{tpu_custom_call.1} parent=75 // pred_check
          %p472 = pneg %p178
        $region82: #{tpu_custom_call.1} parent=75 // pred_check_branch
          %474 = sbr.rel (%p472) target = $region84
        $region83: #{tpu_custom_call.1} parent=75 // pred_region
          %475 = dma.done [#allocation6], 128
        $region84: #{tpu_custom_call.1} parent=75 // pred_fallthru
          _
        // Predicated region
        $region85: #{tpu_custom_call.1} parent=75 // pred_check
          %p476 = pneg %p220
        $region86: #{tpu_custom_call.1} parent=75 // pred_check_branch
          %478 = sbr.rel (%p476) target = $region88
        $region87: #{tpu_custom_call.1} parent=75 // pred_region
          %479 = dma.done [#allocation6], 16
        $region88: #{tpu_custom_call.1} parent=75 // pred_fallthru
          _
        // Predicated region
        $region89: #{tpu_custom_call.1} parent=75 // pred_check
          %p480 = pneg %p241
        $region90: #{tpu_custom_call.1} parent=75 // pred_check_branch
          %482 = sbr.rel (%p480) target = $region92
        $region91: #{tpu_custom_call.1} parent=75 // pred_region
          %483 = dma.done [#allocation9], 16
        $region92: #{tpu_custom_call.1} parent=75 // pred_fallthru
          _
        // Predicated region
        $region93: #{tpu_custom_call.1} parent=75 // pred_check
          %p484 = pneg %p283
        $region94: #{tpu_custom_call.1} parent=75 // pred_check_branch
          %486 = sbr.rel (%p484) target = $region96
        $region95: #{tpu_custom_call.1} parent=75 // pred_region
          %487 = dma.done [#allocation9], 16
        $region96: #{tpu_custom_call.1} parent=75 // pred_fallthru
          _
        %s488 = smul.u32 4, %s31
        %p489 = scmp.lt.s32.totalorder %s488, 7
        %s490 = scalar_select %p489, %s488, 7
        %s491 = smul.addr %s490, 2
        %s492 = smul.addr %s491, 8
        %s493 = scalar_lea.vmem %s0, %s492
        %p494 = pneg %p52
        %p495 = pneg %p49
        %p496 = pneg %p73
        %p497 = pneg %p70
        %p498 = pneg %p94
        %p499 = pneg %p91
        %p500 = pneg %p115
        %p501 = pneg %p112
        %p502 = pneg %p136
        %p503 = pneg %p133
        %p504 = pneg %p157
        %p505 = pneg %p154
        %p506 = pneg %p178
        %p507 = pneg %p175
        %p508 = pneg %p199
        %p509 = pneg %p196
        %p510 = pneg %p220
        %p511 = pneg %p217
        %p512 = pneg %p241
        %p513 = pneg %p238
        %p514 = pneg %p262
        %p515 = pneg %p259
        %p516 = pneg %p283
        %p517 = pneg %p280
        %p518 = pneg %p304
        %p519 = pneg %p301
        %p520 = pneg %p325
        %p521 = pneg %p322
        %p522 = pneg %p351
        %p523 = pneg %p348
        %s524 = sand.u32 %s338, 1
        %s525 = scalar_lea.sflag [#allocation4], %s524
        %s526 = sand.u32 %s338, 1
        %s527 = smul.addr %s526, 64
        %s528 = scalar_lea.vmem [#allocation11], %s527
        %s529 = smul.u32 4, %s31
        %p530 = scmp.lt.s32.totalorder %s529, 7
        %s531 = scalar_select %p530, %s529, 7
        %s532 = smul.addr %s531, 2
        %s533 = smul.addr %s532, 8
        %s534 = scalar_lea.vmem %s0, %s533
        %s535 = smul.u32 4, %s31
        %s536 = smul.u32 4, %s31
        %v538 = vld [vmem:[%s1] sm:$0x1]
        %v539 = vld [vmem:[%s2] sm:$0x1]
        %v540 = vld [vmem:[#allocation2] sm:$0x1]
        %v541 = vld [vmem:[%s4] sm:$0xf]
        %v542 = vld [vmem:[%s4 + $0x4] sm:$0xf]
        %v543 = vld [vmem:[%s4 + $0x8] sm:$0xf]
        %v544 = vld [vmem:[%s4 + $0xc] sm:$0xf]
        %v545 = vld [vmem:[%s4 + $0x10] sm:$0xf]
        %v546 = vld [vmem:[%s4 + $0x14] sm:$0xf]
        %v547 = vld [vmem:[%s4 + $0x18] sm:$0xf]
        %v548 = vld [vmem:[%s4 + $0x1c] sm:$0xf]
        %v549 = vld [vmem:[%s4 + $0x20] sm:$0xf]
        %v550 = vld [vmem:[%s4 + $0x24] sm:$0xf]
        %v551 = vld [vmem:[%s4 + $0x28] sm:$0xf]
        %v552 = vld [vmem:[%s4 + $0x2c] sm:$0xf]
        %v553 = vld [vmem:[%s4 + $0x30] sm:$0xf]
        %v554 = vld [vmem:[%s4 + $0x34] sm:$0xf]
        %v555 = vld [vmem:[%s4 + $0x38] sm:$0xf]
        %v556 = vld [vmem:[%s4 + $0x3c] sm:$0xf]
        %v557 = vld [vmem:[%s5] sm:$0xff]
        %v558 = vld [vmem:[%s5 + $0x8] sm:$0xff]
        %v559 = vld [vmem:[%s5 + $0x10] sm:$0xff]
        %v560 = vld [vmem:[%s5 + $0x18] sm:$0xff]
        %v561 = vld [vmem:[%s5 + $0x20] sm:$0xff]
        %v562 = vld [vmem:[%s5 + $0x28] sm:$0xff]
        %v563 = vld [vmem:[%s5 + $0x30] sm:$0xff]
        %v564 = vld [vmem:[%s5 + $0x38] sm:$0xff]
        %v565 = vld [vmem:[%s5 + $0x40] sm:$0xff]
        %v566 = vld [vmem:[%s5 + $0x48] sm:$0xff]
        %v567 = vld [vmem:[%s5 + $0x50] sm:$0xff]
        %v568 = vld [vmem:[%s5 + $0x58] sm:$0xff]
        %v569 = vld [vmem:[%s5 + $0x60] sm:$0xff]
        %v570 = vld [vmem:[%s5 + $0x68] sm:$0xff]
        %v571 = vld [vmem:[%s5 + $0x70] sm:$0xff]
        %v572 = vld [vmem:[%s5 + $0x78] sm:$0xff]
        %v573 = vld [vmem:[#allocation5] sm:$0xf]
        %v574 = vld [vmem:[#allocation5 + $0x4] sm:$0xf]
        %v575 = vld [vmem:[%s7] sm:$0xff]
        %v576 = vld [vmem:[%s7 + $0x8] sm:$0xff]
        %v577 = vld [vmem:[%s534] sm:$0xff]
        %v578 = vld [vmem:[%s534 + $0x8] sm:$0xff]
        %579 = vadd.xlane.f32.xlu0 %v577
        %v580 = vpop.xlane.xlu0 %579
        %581 = vadd.xlane.f32.xlu0 %v578
        %v582 = vpop.xlane.xlu0 %581
        %v583 = vmul.f32 %v580, 0.03125
        %v584 = vmul.f32 %v582, 0.03125
        %v585 = vsub.f32 %v577, %v583
        %v586 = vsub.f32 %v578, %v584
        %v588 = vlaneseq
        %v589 = vshrl.u32 %v588, 7
        %v590 = vsub.s32 0, %v589
        %v591 = vrot.slane %v538, %v590
        %v593 = vmul.f32 %v585, %v591
        %v594 = vmul.f32 %v586, %v591
        %v595 = vmul.f32 %v593, %v593
        %v596 = vmul.f32 %v594, %v594
        %597 = vadd.xlane.f32.xlu0 %v595
        %v598 = vpop.xlane.xlu0 %597
        %599 = vadd.xlane.f32.xlu0 %v596
        %v600 = vpop.xlane.xlu0 %599
        %v601 = vmul.f32 %v598, 0.03125
        %v602 = vmul.f32 %v600, 0.03125
        %v603 = vadd.f32 %v601, 1e-05
        %v604 = vadd.f32 %v602, 1e-05
        %v605 = vrsqrt.pop %v603
        %v606 = vrsqrt.pop %v604
        %v607 = vmul.f32 %v593, %v605
        %v608 = vmul.f32 %v594, %v606
        %v610 = vlaneseq
        %v611 = vshrl.u32 %v610, 7
        %v612 = vsub.s32 0, %v611
        %v613 = vrot.slane %v539, %v612
        %v615 = vmul.f32 %v607, %v613
        %v616 = vmul.f32 %v608, %v613
        %v618 = vlaneseq
        %v619 = vshrl.u32 %v618, 7
        %v620 = vsub.s32 0, %v619
        %v621 = vrot.slane %v540, %v620
        %v623 = vadd.f32 %v615, %v621
        %v624 = vadd.f32 %v616, %v621
        %v625 = vpack.c.bf16 %v624, %v623
        %627 = vset.pattern.permute.xlu0 0
        %628 = vperm.xlu0 %627, %v557
        %v629 = vpop.permute.xlu0 %628
        %632 = vset.pattern.permute.xlu0 0
        %633 = vperm.xlu0 %632, %v558
        %v634 = vpop.permute.xlu0 %633
        %637 = vset.pattern.permute.xlu0 0
        %638 = vperm.xlu0 %637, %v559
        %v639 = vpop.permute.xlu0 %638
        %642 = vset.pattern.permute.xlu0 0
        %643 = vperm.xlu0 %642, %v560
        %v644 = vpop.permute.xlu0 %643
        %647 = vset.pattern.permute.xlu0 0
        %648 = vperm.xlu0 %647, %v561
        %v649 = vpop.permute.xlu0 %648
        %652 = vset.pattern.permute.xlu0 0
        %653 = vperm.xlu0 %652, %v562
        %v654 = vpop.permute.xlu0 %653
        %657 = vset.pattern.permute.xlu0 0
        %658 = vperm.xlu0 %657, %v563
        %v659 = vpop.permute.xlu0 %658
        %662 = vset.pattern.permute.xlu0 0
        %663 = vperm.xlu0 %662, %v564
        %v664 = vpop.permute.xlu0 %663
        %667 = vset.pattern.permute.xlu0 0
        %668 = vperm.xlu0 %667, %v565
        %v669 = vpop.permute.xlu0 %668
        %672 = vset.pattern.permute.xlu0 0
        %673 = vperm.xlu0 %672, %v566
        %v674 = vpop.permute.xlu0 %673
        %677 = vset.pattern.permute.xlu0 0
        %678 = vperm.xlu0 %677, %v567
        %v679 = vpop.permute.xlu0 %678
        %682 = vset.pattern.permute.xlu0 0
        %683 = vperm.xlu0 %682, %v568
        %v684 = vpop.permute.xlu0 %683
        %687 = vset.pattern.permute.xlu0 0
        %688 = vperm.xlu0 %687, %v569
        %v689 = vpop.permute.xlu0 %688
        %692 = vset.pattern.permute.xlu0 0
        %693 = vperm.xlu0 %692, %v570
        %v694 = vpop.permute.xlu0 %693
        %697 = vset.pattern.permute.xlu0 0
        %698 = vperm.xlu0 %697, %v571
        %v699 = vpop.permute.xlu0 %698
        %702 = vset.pattern.permute.xlu0 0
        %703 = vperm.xlu0 %702, %v572
        %v704 = vpop.permute.xlu0 %703
        %v722 = vunpack.c.l.b16 %v541
        %v723 = vunpack.c.l.b16 %v542
        %v724 = vunpack.c.l.b16 %v543
        %v725 = vunpack.c.l.b16 %v544
        %v726 = vunpack.c.l.b16 %v545
        %v727 = vunpack.c.l.b16 %v546
        %v728 = vunpack.c.l.b16 %v547
        %v729 = vunpack.c.l.b16 %v548
        %v730 = vunpack.c.l.b16 %v549
        %v731 = vunpack.c.l.b16 %v550
        %v732 = vunpack.c.l.b16 %v551
        %v733 = vunpack.c.l.b16 %v552
        %v734 = vunpack.c.l.b16 %v553
        %v735 = vunpack.c.l.b16 %v554
        %v736 = vunpack.c.l.b16 %v555
        %v737 = vunpack.c.l.b16 %v556
        %v738 = vpack.c.b16 %v723, %v722
        %v739 = vpack.c.b16 %v725, %v724
        %v740 = vpack.c.b16 %v727, %v726
        %v741 = vpack.c.b16 %v729, %v728
        %v742 = vpack.c.b16 %v731, %v730
        %v743 = vpack.c.b16 %v733, %v732
        %v744 = vpack.c.b16 %v735, %v734
        %v745 = vpack.c.b16 %v737, %v736
        %vm746 = vcmask 130048
        %v748 = vsel %vm746, %v738, 0
        %v751 = vsel %vm746, %v739, 0
        %v754 = vsel %vm746, %v740, 0
        %v757 = vsel %vm746, %v741, 0
        %v760 = vsel %vm746, %v742, 0
        %v763 = vsel %vm746, %v743, 0
        %v766 = vsel %vm746, %v744, 0
        %v769 = vsel %vm746, %v745, 0
        %771 = vmatprep.subr.bf16.mxu0 0
        %772 = vmatpush1.bf16.msra.mxu0 %v625
        %773 = vmatprep.subr.bf16.mxu0 0
        %774 = vmatpush1.bf16.msra.mxu0 0
        %775 = vmatprep.subr.bf16.mxu0 0
        %776 = vmatpush1.bf16.msra.mxu0 0
        %777 = vmatprep.subr.bf16.mxu0 0
        %778 = vmatpush1.bf16.msra.mxu0 0
        %779 = vmatprep.subr.bf16.mxu0 0
        %780 = vmatpush1.bf16.msra.mxu0 0
        %781 = vmatprep.subr.bf16.mxu0 0
        %782 = vmatpush1.bf16.msra.mxu0 0
        %783 = vmatprep.subr.bf16.mxu0 0
        %784 = vmatpush1.bf16.msra.mxu0 0
        %785 = vmatprep.subr.bf16.mxu0 0
        %786 = vmatpush1.bf16.msra.mxu0 0
        %787 = vmatprep.subr.bf16.mxu0 0
        %788 = vmatpush1.bf16.msra.mxu0 0
        %789 = vmatprep.subr.bf16.mxu0 0
        %790 = vmatpush1.bf16.msra.mxu0 0
        %791 = vmatprep.subr.bf16.mxu0 0
        %792 = vmatpush1.bf16.msra.mxu0 0
        %793 = vmatprep.subr.bf16.mxu0 0
        %794 = vmatpush1.bf16.msra.mxu0 0
        %795 = vmatprep.subr.bf16.mxu0 0
        %796 = vmatpush1.bf16.msra.mxu0 0
        %797 = vmatprep.subr.bf16.mxu0 0
        %798 = vmatpush1.bf16.msra.mxu0 0
        %799 = vmatprep.subr.bf16.mxu0 0
        %800 = vmatpush1.bf16.msra.mxu0 0
        %801 = vmatprep.subr.bf16.mxu0 0
        %802 = vmatpush1.bf16.msra.mxu0 0
        %803 = vmatprep.mubr.bf16.mxu0 0
        %804 = vmatmul.mubr.bf16.gmra.mrb[0].mxu0 %v748
        %v805 = vpop.f32.mrb[0].mxu0
        %v806 = vadd.f32 %v629, %v805
        %v807 = vpop.f32.mrb[0].mxu0
        %v808 = vpop.f32.mrb[0].mxu0
        %v809 = vadd.f32 %v634, %v808
        %v810 = vpop.f32.mrb[0].mxu0
        %811 = vmatprep.mubr.bf16.mxu0 0
        %812 = vmatmul.mubr.bf16.gmra.mrb[0].mxu0 %v751
        %v813 = vpop.f32.mrb[0].mxu0
        %v814 = vadd.f32 %v639, %v813
        %v815 = vpop.f32.mrb[0].mxu0
        %v816 = vpop.f32.mrb[0].mxu0
        %v817 = vadd.f32 %v644, %v816
        %v818 = vpop.f32.mrb[0].mxu0
        %819 = vmatprep.mubr.bf16.mxu0 0
        %820 = vmatmul.mubr.bf16.gmra.mrb[0].mxu0 %v754
        %v821 = vpop.f32.mrb[0].mxu0
        %v822 = vadd.f32 %v649, %v821
        %v823 = vpop.f32.mrb[0].mxu0
        %v824 = vpop.f32.mrb[0].mxu0
        %v825 = vadd.f32 %v654, %v824
        %v826 = vpop.f32.mrb[0].mxu0
        %827 = vmatprep.mubr.bf16.mxu0 0
        %828 = vmatmul.mubr.bf16.gmra.mrb[0].mxu0 %v757
        %v829 = vpop.f32.mrb[0].mxu0
        %v830 = vadd.f32 %v659, %v829
        %v831 = vpop.f32.mrb[0].mxu0
        %v832 = vpop.f32.mrb[0].mxu0
        %v833 = vadd.f32 %v664, %v832
        %v834 = vpop.f32.mrb[0].mxu0
        %835 = vmatprep.mubr.bf16.mxu0 0
        %836 = vmatmul.mubr.bf16.gmra.mrb[0].mxu0 %v760
        %v837 = vpop.f32.mrb[0].mxu0
        %v838 = vadd.f32 %v669, %v837
        %v839 = vpop.f32.mrb[0].mxu0
        %v840 = vpop.f32.mrb[0].mxu0
        %v841 = vadd.f32 %v674, %v840
        %v842 = vpop.f32.mrb[0].mxu0
        %843 = vmatprep.mubr.bf16.mxu0 0
        %844 = vmatmul.mubr.bf16.gmra.mrb[0].mxu0 %v763
        %v845 = vpop.f32.mrb[0].mxu0
        %v846 = vadd.f32 %v679, %v845
        %v847 = vpop.f32.mrb[0].mxu0
        %v848 = vpop.f32.mrb[0].mxu0
        %v849 = vadd.f32 %v684, %v848
        %v850 = vpop.f32.mrb[0].mxu0
        %851 = vmatprep.mubr.bf16.mxu0 0
        %852 = vmatmul.mubr.bf16.gmra.mrb[0].mxu0 %v766
        %v853 = vpop.f32.mrb[0].mxu0
        %v854 = vadd.f32 %v689, %v853
        %v855 = vpop.f32.mrb[0].mxu0
        %v856 = vpop.f32.mrb[0].mxu0
        %v857 = vadd.f32 %v694, %v856
        %v858 = vpop.f32.mrb[0].mxu0
        %859 = vmatprep.mubr.bf16.mxu0 0
        %860 = vmatmul.mubr.bf16.gmra.mrb[0].mxu0 %v769
        %v861 = vpop.f32.mrb[0].mxu0
        %v862 = vadd.f32 %v699, %v861
        %v863 = vpop.f32.mrb[0].mxu0
        %v864 = vpop.f32.mrb[0].mxu0
        %v865 = vadd.f32 %v704, %v864
        %v866 = vpop.f32.mrb[0].mxu0
        %867 = vdwg.mxu0
        %v868 = vmul.f32 %v806, 0.5
        %v869 = vmul.f32 %v809, 0.5
        %v870 = vmul.f32 %v814, 0.5
        %v871 = vmul.f32 %v817, 0.5
        %v872 = vmul.f32 %v822, 0.5
        %v873 = vmul.f32 %v825, 0.5
        %v874 = vmul.f32 %v830, 0.5
        %v875 = vmul.f32 %v833, 0.5
        %v876 = vmul.f32 %v838, 0.5
        %v877 = vmul.f32 %v841, 0.5
        %v878 = vmul.f32 %v846, 0.5
        %v879 = vmul.f32 %v849, 0.5
        %v880 = vmul.f32 %v854, 0.5
        %v881 = vmul.f32 %v857, 0.5
        %v882 = vmul.f32 %v862, 0.5
        %v883 = vmul.f32 %v865, 0.5
        %v884 = vmul.f32 %v806, 0.70710677
        %v885 = vmul.f32 %v809, 0.70710677
        %v886 = vmul.f32 %v814, 0.70710677
        %v887 = vmul.f32 %v817, 0.70710677
        %v888 = vmul.f32 %v822, 0.70710677
        %v889 = vmul.f32 %v825, 0.70710677
        %v890 = vmul.f32 %v830, 0.70710677
        %v891 = vmul.f32 %v833, 0.70710677
        %v892 = vmul.f32 %v838, 0.70710677
        %v893 = vmul.f32 %v841, 0.70710677
        %v894 = vmul.f32 %v846, 0.70710677
        %v895 = vmul.f32 %v849, 0.70710677
        %v896 = vmul.f32 %v854, 0.70710677
        %v897 = vmul.f32 %v857, 0.70710677
        %v898 = vmul.f32 %v862, 0.70710677
        %v899 = vmul.f32 %v865, 0.70710677
        %v900 = verf.f32.pop %v884
        %v901 = verf.f32.pop %v885
        %v902 = verf.f32.pop %v886
        %v903 = verf.f32.pop %v887
        %v904 = verf.f32.pop %v888
        %v905 = verf.f32.pop %v889
        %v906 = verf.f32.pop %v890
        %v907 = verf.f32.pop %v891
        %v908 = verf.f32.pop %v892
        %v909 = verf.f32.pop %v893
        %v910 = verf.f32.pop %v894
        %v911 = verf.f32.pop %v895
        %v912 = verf.f32.pop %v896
        %v913 = verf.f32.pop %v897
        %v914 = verf.f32.pop %v898
        %v915 = verf.f32.pop %v899
        %v916 = vadd.f32 %v900, 1.0
        %v917 = vadd.f32 %v901, 1.0
        %v918 = vadd.f32 %v902, 1.0
        %v919 = vadd.f32 %v903, 1.0
        %v920 = vadd.f32 %v904, 1.0
        %v921 = vadd.f32 %v905, 1.0
        %v922 = vadd.f32 %v906, 1.0
        %v923 = vadd.f32 %v907, 1.0
        %v924 = vadd.f32 %v908, 1.0
        %v925 = vadd.f32 %v909, 1.0
        %v926 = vadd.f32 %v910, 1.0
        %v927 = vadd.f32 %v911, 1.0
        %v928 = vadd.f32 %v912, 1.0
        %v929 = vadd.f32 %v913, 1.0
        %v930 = vadd.f32 %v914, 1.0
        %v931 = vadd.f32 %v915, 1.0
        %v932 = vmul.f32 %v868, %v916
        %v933 = vmul.f32 %v869, %v917
        %v934 = vmul.f32 %v870, %v918
        %v935 = vmul.f32 %v871, %v919
        %v936 = vmul.f32 %v872, %v920
        %v937 = vmul.f32 %v873, %v921
        %v938 = vmul.f32 %v874, %v922
        %v939 = vmul.f32 %v875, %v923
        %v940 = vmul.f32 %v876, %v924
        %v941 = vmul.f32 %v877, %v925
        %v942 = vmul.f32 %v878, %v926
        %v943 = vmul.f32 %v879, %v927
        %v944 = vmul.f32 %v880, %v928
        %v945 = vmul.f32 %v881, %v929
        %v946 = vmul.f32 %v882, %v930
        %v947 = vmul.f32 %v883, %v931
        %v948 = vpack.c.bf16 %v933, %v932
        %v949 = vpack.c.bf16 %v935, %v934
        %v950 = vpack.c.bf16 %v937, %v936
        %v951 = vpack.c.bf16 %v939, %v938
        %v952 = vpack.c.bf16 %v941, %v940
        %v953 = vpack.c.bf16 %v943, %v942
        %v954 = vpack.c.bf16 %v945, %v944
        %v955 = vpack.c.bf16 %v947, %v946
        %957 = vset.pattern.permute.xlu0 0
        %958 = vperm.xlu0 %957, %v575
        %v959 = vpop.permute.xlu0 %958
        %962 = vset.pattern.permute.xlu0 0
        %963 = vperm.xlu0 %962, %v576
        %v964 = vpop.permute.xlu0 %963
        %v968 = vunpack.c.l.b16 %v573
        %v969 = vunpack.c.l.b16 %v574
        %v970 = vpack.c.b16 %v969, %v968
        %972 = vmatprep.subr.bf16.mxu0 0
        %973 = vmatpush1.bf16.msra.mxu0 %v948
        %974 = vmatprep.subr.bf16.mxu0 0
        %975 = vmatpush1.bf16.msra.mxu0 %v949
        %976 = vmatprep.subr.bf16.mxu0 0
        %977 = vmatpush1.bf16.msra.mxu0 %v950
        %978 = vmatprep.subr.bf16.mxu0 0
        %979 = vmatpush1.bf16.msra.mxu0 %v951
        %980 = vmatprep.subr.bf16.mxu0 0
        %981 = vmatpush1.bf16.msra.mxu0 %v952
        %982 = vmatprep.subr.bf16.mxu0 0
        %983 = vmatpush1.bf16.msra.mxu0 %v953
        %984 = vmatprep.subr.bf16.mxu0 0
        %985 = vmatpush1.bf16.msra.mxu0 %v954
        %986 = vmatprep.subr.bf16.mxu0 0
        %987 = vmatpush1.bf16.msra.mxu0 %v955
        %988 = vmatprep.subr.bf16.mxu0 0
        %989 = vmatpush1.bf16.msra.mxu0 0
        %990 = vmatprep.subr.bf16.mxu0 0
        %991 = vmatpush1.bf16.msra.mxu0 0
        %992 = vmatprep.subr.bf16.mxu0 0
        %993 = vmatpush1.bf16.msra.mxu0 0
        %994 = vmatprep.subr.bf16.mxu0 0
        %995 = vmatpush1.bf16.msra.mxu0 0
        %996 = vmatprep.subr.bf16.mxu0 0
        %997 = vmatpush1.bf16.msra.mxu0 0
        %998 = vmatprep.subr.bf16.mxu0 0
        %999 = vmatpush1.bf16.msra.mxu0 0
        %1000 = vmatprep.subr.bf16.mxu0 0
        %1001 = vmatpush1.bf16.msra.mxu0 0
        %1002 = vmatprep.subr.bf16.mxu0 0
        %1003 = vmatpush1.bf16.msra.mxu0 0
        %1004 = vmatprep.mubr.bf16.mxu0 0
        %1005 = vmatmul.mubr.bf16.gmra.mrb[0].mxu0 %v970
        %v1006 = vpop.f32.mrb[0].mxu0
        %v1007 = vadd.f32 %v959, %v1006
        %v1008 = vpop.f32.mrb[0].mxu0
        %v1009 = vpop.f32.mrb[0].mxu0
        %v1010 = vadd.f32 %v964, %v1009
        %v1011 = vpop.f32.mrb[0].mxu0
        %1012 = vdwg.mxu0
        %v1013 = vmul.f32 %v1007, %v591
        %v1014 = vmul.f32 %v1010, %v591
        %v1015 = vadd.f32 %v577, %v1013
        %v1016 = vadd.f32 %v578, %v1014
        %1017 = vst [vmem:[%s528] sm:$0xff] %v1015
        %1018 = vst [vmem:[%s528 + $0x8] sm:$0xff] %v1016
        %s1019 = scalar_lea.vmem %s534, 16
        %v1020 = vld [vmem:[%s1019] sm:$0xff]
        %v1021 = vld [vmem:[%s1019 + $0x8] sm:$0xff]
        %1022 = vadd.xlane.f32.xlu0 %v1020
        %v1023 = vpop.xlane.xlu0 %1022
        %1024 = vadd.xlane.f32.xlu0 %v1021
        %v1025 = vpop.xlane.xlu0 %1024
        %v1026 = vmul.f32 %v1023, 0.03125
        %v1027 = vmul.f32 %v1025, 0.03125
        %v1028 = vsub.f32 %v1020, %v1026
        %v1029 = vsub.f32 %v1021, %v1027
        %v1030 = vmul.f32 %v1028, %v591
        %v1031 = vmul.f32 %v1029, %v591
        %v1032 = vmul.f32 %v1030, %v1030
        %v1033 = vmul.f32 %v1031, %v1031
        %1034 = vadd.xlane.f32.xlu0 %v1032
        %v1035 = vpop.xlane.xlu0 %1034
        %1036 = vadd.xlane.f32.xlu0 %v1033
        %v1037 = vpop.xlane.xlu0 %1036
        %v1038 = vmul.f32 %v1035, 0.03125
        %v1039 = vmul.f32 %v1037, 0.03125
        %v1040 = vadd.f32 %v1038, 1e-05
        %v1041 = vadd.f32 %v1039, 1e-05
        %v1042 = vrsqrt.pop %v1040
        %v1043 = vrsqrt.pop %v1041
        %v1044 = vmul.f32 %v1030, %v1042
        %v1045 = vmul.f32 %v1031, %v1043
        %v1046 = vmul.f32 %v1044, %v613
        %v1047 = vmul.f32 %v1045, %v613
        %v1048 = vadd.f32 %v1046, %v621
        %v1049 = vadd.f32 %v1047, %v621
        %v1050 = vpack.c.bf16 %v1049, %v1048
        %1051 = vmatprep.subr.bf16.mxu0 0
        %1052 = vmatpush1.bf16.msra.mxu0 %v1050
        %1053 = vmatprep.subr.bf16.mxu0 0
        %1054 = vmatpush1.bf16.msra.mxu0 0
        %1055 = vmatprep.subr.bf16.mxu0 0
        %1056 = vmatpush1.bf16.msra.mxu0 0
        %1057 = vmatprep.subr.bf16.mxu0 0
        %1058 = vmatpush1.bf16.msra.mxu0 0
        %1059 = vmatprep.subr.bf16.mxu0 0
        %1060 = vmatpush1.bf16.msra.mxu0 0
        %1061 = vmatprep.subr.bf16.mxu0 0
        %1062 = vmatpush1.bf16.msra.mxu0 0
        %1063 = vmatprep.subr.bf16.mxu0 0
        %1064 = vmatpush1.bf16.msra.mxu0 0
        %1065 = vmatprep.subr.bf16.mxu0 0
        %1066 = vmatpush1.bf16.msra.mxu0 0
        %1067 = vmatprep.subr.bf16.mxu0 0
        %1068 = vmatpush1.bf16.msra.mxu0 0
        %1069 = vmatprep.subr.bf16.mxu0 0
        %1070 = vmatpush1.bf16.msra.mxu0 0
        %1071 = vmatprep.subr.bf16.mxu0 0
        %1072 = vmatpush1.bf16.msra.mxu0 0
        %1073 = vmatprep.subr.bf16.mxu0 0
        %1074 = vmatpush1.bf16.msra.mxu0 0
        %1075 = vmatprep.subr.bf16.mxu0 0
        %1076 = vmatpush1.bf16.msra.mxu0 0
        %1077 = vmatprep.subr.bf16.mxu0 0
        %1078 = vmatpush1.bf16.msra.mxu0 0
        %1079 = vmatprep.subr.bf16.mxu0 0
        %1080 = vmatpush1.bf16.msra.mxu0 0
        %1081 = vmatprep.subr.bf16.mxu0 0
        %1082 = vmatpush1.bf16.msra.mxu0 0
        %1083 = vmatprep.mubr.bf16.mxu0 0
        %1084 = vmatmul.mubr.bf16.gmra.mrb[0].mxu0 %v748
        %v1085 = vpop.f32.mrb[0].mxu0
        %v1086 = vadd.f32 %v629, %v1085
        %v1087 = vpop.f32.mrb[0].mxu0
        %v1088 = vpop.f32.mrb[0].mxu0
        %v1089 = vadd.f32 %v634, %v1088
        %v1090 = vpop.f32.mrb[0].mxu0
        %1091 = vmatprep.mubr.bf16.mxu0 0
        %1092 = vmatmul.mubr.bf16.gmra.mrb[0].mxu0 %v751
        %v1093 = vpop.f32.mrb[0].mxu0
        %v1094 = vadd.f32 %v639, %v1093
        %v1095 = vpop.f32.mrb[0].mxu0
        %v1096 = vpop.f32.mrb[0].mxu0
        %v1097 = vadd.f32 %v644, %v1096
        %v1098 = vpop.f32.mrb[0].mxu0
        %1099 = vmatprep.mubr.bf16.mxu0 0
        %1100 = vmatmul.mubr.bf16.gmra.mrb[0].mxu0 %v754
        %v1101 = vpop.f32.mrb[0].mxu0
        %v1102 = vadd.f32 %v649, %v1101
        %v1103 = vpop.f32.mrb[0].mxu0
        %v1104 = vpop.f32.mrb[0].mxu0
        %v1105 = vadd.f32 %v654, %v1104
        %v1106 = vpop.f32.mrb[0].mxu0
        %1107 = vmatprep.mubr.bf16.mxu0 0
        %1108 = vmatmul.mubr.bf16.gmra.mrb[0].mxu0 %v757
        %v1109 = vpop.f32.mrb[0].mxu0
        %v1110 = vadd.f32 %v659, %v1109
        %v1111 = vpop.f32.mrb[0].mxu0
        %v1112 = vpop.f32.mrb[0].mxu0
        %v1113 = vadd.f32 %v664, %v1112
        %v1114 = vpop.f32.mrb[0].mxu0
        %1115 = vmatprep.mubr.bf16.mxu0 0
        %1116 = vmatmul.mubr.bf16.gmra.mrb[0].mxu0 %v760
        %v1117 = vpop.f32.mrb[0].mxu0
        %v1118 = vadd.f32 %v669, %v1117
        %v1119 = vpop.f32.mrb[0].mxu0
        %v1120 = vpop.f32.mrb[0].mxu0
        %v1121 = vadd.f32 %v674, %v1120
        %v1122 = vpop.f32.mrb[0].mxu0
        %1123 = vmatprep.mubr.bf16.mxu0 0
        %1124 = vmatmul.mubr.bf16.gmra.mrb[0].mxu0 %v763
        %v1125 = vpop.f32.mrb[0].mxu0
        %v1126 = vadd.f32 %v679, %v1125
        %v1127 = vpop.f32.mrb[0].mxu0
        %v1128 = vpop.f32.mrb[0].mxu0
        %v1129 = vadd.f32 %v684, %v1128
        %v1130 = vpop.f32.mrb[0].mxu0
        %1131 = vmatprep.mubr.bf16.mxu0 0
        %1132 = vmatmul.mubr.bf16.gmra.mrb[0].mxu0 %v766
        %v1133 = vpop.f32.mrb[0].mxu0
        %v1134 = vadd.f32 %v689, %v1133
        %v1135 = vpop.f32.mrb[0].mxu0
        %v1136 = vpop.f32.mrb[0].mxu0
        %v1137 = vadd.f32 %v694, %v1136
        %v1138 = vpop.f32.mrb[0].mxu0
        %1139 = vmatprep.mubr.bf16.mxu0 0
        %1140 = vmatmul.mubr.bf16.gmra.mrb[0].mxu0 %v769
        %v1141 = vpop.f32.mrb[0].mxu0
        %v1142 = vadd.f32 %v699, %v1141
        %v1143 = vpop.f32.mrb[0].mxu0
        %v1144 = vpop.f32.mrb[0].mxu0
        %v1145 = vadd.f32 %v704, %v1144
        %v1146 = vpop.f32.mrb[0].mxu0
        %1147 = vdwg.mxu0
        %v1148 = vmul.f32 %v1086, 0.5
        %v1149 = vmul.f32 %v1089, 0.5
        %v1150 = vmul.f32 %v1094, 0.5
        %v1151 = vmul.f32 %v1097, 0.5
        %v1152 = vmul.f32 %v1102, 0.5
        %v1153 = vmul.f32 %v1105, 0.5
        %v1154 = vmul.f32 %v1110, 0.5
        %v1155 = vmul.f32 %v1113, 0.5
        %v1156 = vmul.f32 %v1118, 0.5
        %v1157 = vmul.f32 %v1121, 0.5
        %v1158 = vmul.f32 %v1126, 0.5
        %v1159 = vmul.f32 %v1129, 0.5
        %v1160 = vmul.f32 %v1134, 0.5
        %v1161 = vmul.f32 %v1137, 0.5
        %v1162 = vmul.f32 %v1142, 0.5
        %v1163 = vmul.f32 %v1145, 0.5
        %v1164 = vmul.f32 %v1086, 0.70710677
        %v1165 = vmul.f32 %v1089, 0.70710677
        %v1166 = vmul.f32 %v1094, 0.70710677
        %v1167 = vmul.f32 %v1097, 0.70710677
        %v1168 = vmul.f32 %v1102, 0.70710677
        %v1169 = vmul.f32 %v1105, 0.70710677
        %v1170 = vmul.f32 %v1110, 0.70710677
        %v1171 = vmul.f32 %v1113, 0.70710677
        %v1172 = vmul.f32 %v1118, 0.70710677
        %v1173 = vmul.f32 %v1121, 0.70710677
        %v1174 = vmul.f32 %v1126, 0.70710677
        %v1175 = vmul.f32 %v1129, 0.70710677
        %v1176 = vmul.f32 %v1134, 0.70710677
        %v1177 = vmul.f32 %v1137, 0.70710677
        %v1178 = vmul.f32 %v1142, 0.70710677
        %v1179 = vmul.f32 %v1145, 0.70710677
        %v1180 = verf.f32.pop %v1164
        %v1181 = verf.f32.pop %v1165
        %v1182 = verf.f32.pop %v1166
        %v1183 = verf.f32.pop %v1167
        %v1184 = verf.f32.pop %v1168
        %v1185 = verf.f32.pop %v1169
        %v1186 = verf.f32.pop %v1170
        %v1187 = verf.f32.pop %v1171
        %v1188 = verf.f32.pop %v1172
        %v1189 = verf.f32.pop %v1173
        %v1190 = verf.f32.pop %v1174
        %v1191 = verf.f32.pop %v1175
        %v1192 = verf.f32.pop %v1176
        %v1193 = verf.f32.pop %v1177
        %v1194 = verf.f32.pop %v1178
        %v1195 = verf.f32.pop %v1179
        %v1196 = vadd.f32 %v1180, 1.0
        %v1197 = vadd.f32 %v1181, 1.0
        %v1198 = vadd.f32 %v1182, 1.0
        %v1199 = vadd.f32 %v1183, 1.0
        %v1200 = vadd.f32 %v1184, 1.0
        %v1201 = vadd.f32 %v1185, 1.0
        %v1202 = vadd.f32 %v1186, 1.0
        %v1203 = vadd.f32 %v1187, 1.0
        %v1204 = vadd.f32 %v1188, 1.0
        %v1205 = vadd.f32 %v1189, 1.0
        %v1206 = vadd.f32 %v1190, 1.0
        %v1207 = vadd.f32 %v1191, 1.0
        %v1208 = vadd.f32 %v1192, 1.0
        %v1209 = vadd.f32 %v1193, 1.0
        %v1210 = vadd.f32 %v1194, 1.0
        %v1211 = vadd.f32 %v1195, 1.0
        %v1212 = vmul.f32 %v1148, %v1196
        %v1213 = vmul.f32 %v1149, %v1197
        %v1214 = vmul.f32 %v1150, %v1198
        %v1215 = vmul.f32 %v1151, %v1199
        %v1216 = vmul.f32 %v1152, %v1200
        %v1217 = vmul.f32 %v1153, %v1201
        %v1218 = vmul.f32 %v1154, %v1202
        %v1219 = vmul.f32 %v1155, %v1203
        %v1220 = vmul.f32 %v1156, %v1204
        %v1221 = vmul.f32 %v1157, %v1205
        %v1222 = vmul.f32 %v1158, %v1206
        %v1223 = vmul.f32 %v1159, %v1207
        %v1224 = vmul.f32 %v1160, %v1208
        %v1225 = vmul.f32 %v1161, %v1209
        %v1226 = vmul.f32 %v1162, %v1210
        %v1227 = vmul.f32 %v1163, %v1211
        %v1228 = vpack.c.bf16 %v1213, %v1212
        %v1229 = vpack.c.bf16 %v1215, %v1214
        %v1230 = vpack.c.bf16 %v1217, %v1216
        %v1231 = vpack.c.bf16 %v1219, %v1218
        %v1232 = vpack.c.bf16 %v1221, %v1220
        %v1233 = vpack.c.bf16 %v1223, %v1222
        %v1234 = vpack.c.bf16 %v1225, %v1224
        %v1235 = vpack.c.bf16 %v1227, %v1226
        %1236 = vmatprep.subr.bf16.mxu0 0
        %1237 = vmatpush1.bf16.msra.mxu0 %v1228
        %1238 = vmatprep.subr.bf16.mxu0 0
        %1239 = vmatpush1.bf16.msra.mxu0 %v1229
        %1240 = vmatprep.subr.bf16.mxu0 0
        %1241 = vmatpush1.bf16.msra.mxu0 %v1230
        %1242 = vmatprep.subr.bf16.mxu0 0
        %1243 = vmatpush1.bf16.msra.mxu0 %v1231
        %1244 = vmatprep.subr.bf16.mxu0 0
        %1245 = vmatpush1.bf16.msra.mxu0 %v1232
        %1246 = vmatprep.subr.bf16.mxu0 0
        %1247 = vmatpush1.bf16.msra.mxu0 %v1233
        %1248 = vmatprep.subr.bf16.mxu0 0
        %1249 = vmatpush1.bf16.msra.mxu0 %v1234
        %1250 = vmatprep.subr.bf16.mxu0 0
        %1251 = vmatpush1.bf16.msra.mxu0 %v1235
        %1252 = vmatprep.subr.bf16.mxu0 0
        %1253 = vmatpush1.bf16.msra.mxu0 0
        %1254 = vmatprep.subr.bf16.mxu0 0
        %1255 = vmatpush1.bf16.msra.mxu0 0
        %1256 = vmatprep.subr.bf16.mxu0 0
        %1257 = vmatpush1.bf16.msra.mxu0 0
        %1258 = vmatprep.subr.bf16.mxu0 0
        %1259 = vmatpush1.bf16.msra.mxu0 0
        %1260 = vmatprep.subr.bf16.mxu0 0
        %1261 = vmatpush1.bf16.msra.mxu0 0
        %1262 = vmatprep.subr.bf16.mxu0 0
        %1263 = vmatpush1.bf16.msra.mxu0 0
        %1264 = vmatprep.subr.bf16.mxu0 0
        %1265 = vmatpush1.bf16.msra.mxu0 0
        %1266 = vmatprep.subr.bf16.mxu0 0
        %1267 = vmatpush1.bf16.msra.mxu0 0
        %1268 = vmatprep.mubr.bf16.mxu0 0
        %1269 = vmatmul.mubr.bf16.gmra.mrb[0].mxu0 %v970
        %v1270 = vpop.f32.mrb[0].mxu0
        %v1271 = vadd.f32 %v959, %v1270
        %v1272 = vpop.f32.mrb[0].mxu0
        %v1273 = vpop.f32.mrb[0].mxu0
        %v1274 = vadd.f32 %v964, %v1273
        %v1275 = vpop.f32.mrb[0].mxu0
        %1276 = vdwg.mxu0
        %v1277 = vmul.f32 %v1271, %v591
        %v1278 = vmul.f32 %v1274, %v591
        %v1279 = vadd.f32 %v1020, %v1277
        %v1280 = vadd.f32 %v1021, %v1278
        %s1281 = scalar_lea.vmem %s528, 16 [#allocation11]
        %1282 = vst [vmem:[%s1281] sm:$0xff] %v1279
        %1283 = vst [vmem:[%s1281 + $0x8] sm:$0xff] %v1280
        %s1284 = scalar_lea.vmem %s534, 32
        %v1285 = vld [vmem:[%s1284] sm:$0xff]
        %v1286 = vld [vmem:[%s1284 + $0x8] sm:$0xff]
        %1287 = vadd.xlane.f32.xlu0 %v1285
        %v1288 = vpop.xlane.xlu0 %1287
        %1289 = vadd.xlane.f32.xlu0 %v1286
        %v1290 = vpop.xlane.xlu0 %1289
        %v1291 = vmul.f32 %v1288, 0.03125
        %v1292 = vmul.f32 %v1290, 0.03125
        %v1293 = vsub.f32 %v1285, %v1291
        %v1294 = vsub.f32 %v1286, %v1292
        %v1295 = vmul.f32 %v1293, %v591
        %v1296 = vmul.f32 %v1294, %v591
        %v1297 = vmul.f32 %v1295, %v1295
        %v1298 = vmul.f32 %v1296, %v1296
        %1299 = vadd.xlane.f32.xlu0 %v1297
        %v1300 = vpop.xlane.xlu0 %1299
        %1301 = vadd.xlane.f32.xlu0 %v1298
        %v1302 = vpop.xlane.xlu0 %1301
        %v1303 = vmul.f32 %v1300, 0.03125
        %v1304 = vmul.f32 %v1302, 0.03125
        %v1305 = vadd.f32 %v1303, 1e-05
        %v1306 = vadd.f32 %v1304, 1e-05
        %v1307 = vrsqrt.pop %v1305
        %v1308 = vrsqrt.pop %v1306
        %v1309 = vmul.f32 %v1295, %v1307
        %v1310 = vmul.f32 %v1296, %v1308
        %v1311 = vmul.f32 %v1309, %v613
        %v1312 = vmul.f32 %v1310, %v613
        %v1313 = vadd.f32 %v1311, %v621
        %v1314 = vadd.f32 %v1312, %v621
        %v1315 = vpack.c.bf16 %v1314, %v1313
        %1316 = vmatprep.subr.bf16.mxu0 0
        %1317 = vmatpush1.bf16.msra.mxu0 %v1315
        %1318 = vmatprep.subr.bf16.mxu0 0
        %1319 = vmatpush1.bf16.msra.mxu0 0
        %1320 = vmatprep.subr.bf16.mxu0 0
        %1321 = vmatpush1.bf16.msra.mxu0 0
        %1322 = vmatprep.subr.bf16.mxu0 0
        %1323 = vmatpush1.bf16.msra.mxu0 0
        %1324 = vmatprep.subr.bf16.mxu0 0
        %1325 = vmatpush1.bf16.msra.mxu0 0
        %1326 = vmatprep.subr.bf16.mxu0 0
        %1327 = vmatpush1.bf16.msra.mxu0 0
        %1328 = vmatprep.subr.bf16.mxu0 0
        %1329 = vmatpush1.bf16.msra.mxu0 0
        %1330 = vmatprep.subr.bf16.mxu0 0
        %1331 = vmatpush1.bf16.msra.mxu0 0
        %1332 = vmatprep.subr.bf16.mxu0 0
        %1333 = vmatpush1.bf16.msra.mxu0 0
        %1334 = vmatprep.subr.bf16.mxu0 0
        %1335 = vmatpush1.bf16.msra.mxu0 0
        %1336 = vmatprep.subr.bf16.mxu0 0
        %1337 = vmatpush1.bf16.msra.mxu0 0
        %1338 = vmatprep.subr.bf16.mxu0 0
        %1339 = vmatpush1.bf16.msra.mxu0 0
        %1340 = vmatprep.subr.bf16.mxu0 0
        %1341 = vmatpush1.bf16.msra.mxu0 0
        %1342 = vmatprep.subr.bf16.mxu0 0
        %1343 = vmatpush1.bf16.msra.mxu0 0
        %1344 = vmatprep.subr.bf16.mxu0 0
        %1345 = vmatpush1.bf16.msra.mxu0 0
        %1346 = vmatprep.subr.bf16.mxu0 0
        %1347 = vmatpush1.bf16.msra.mxu0 0
        %1348 = vmatprep.mubr.bf16.mxu0 0
        %1349 = vmatmul.mubr.bf16.gmra.mrb[0].mxu0 %v748
        %v1350 = vpop.f32.mrb[0].mxu0
        %v1351 = vadd.f32 %v629, %v1350
        %v1352 = vpop.f32.mrb[0].mxu0
        %v1353 = vpop.f32.mrb[0].mxu0
        %v1354 = vadd.f32 %v634, %v1353
        %v1355 = vpop.f32.mrb[0].mxu0
        %1356 = vmatprep.mubr.bf16.mxu0 0
        %1357 = vmatmul.mubr.bf16.gmra.mrb[0].mxu0 %v751
        %v1358 = vpop.f32.mrb[0].mxu0
        %v1359 = vadd.f32 %v639, %v1358
        %v1360 = vpop.f32.mrb[0].mxu0
        %v1361 = vpop.f32.mrb[0].mxu0
        %v1362 = vadd.f32 %v644, %v1361
        %v1363 = vpop.f32.mrb[0].mxu0
        %1364 = vmatprep.mubr.bf16.mxu0 0
        %1365 = vmatmul.mubr.bf16.gmra.mrb[0].mxu0 %v754
        %v1366 = vpop.f32.mrb[0].mxu0
        %v1367 = vadd.f32 %v649, %v1366
        %v1368 = vpop.f32.mrb[0].mxu0
        %v1369 = vpop.f32.mrb[0].mxu0
        %v1370 = vadd.f32 %v654, %v1369
        %v1371 = vpop.f32.mrb[0].mxu0
        %1372 = vmatprep.mubr.bf16.mxu0 0
        %1373 = vmatmul.mubr.bf16.gmra.mrb[0].mxu0 %v757
        %v1374 = vpop.f32.mrb[0].mxu0
        %v1375 = vadd.f32 %v659, %v1374
        %v1376 = vpop.f32.mrb[0].mxu0
        %v1377 = vpop.f32.mrb[0].mxu0
        %v1378 = vadd.f32 %v664, %v1377
        %v1379 = vpop.f32.mrb[0].mxu0
        %1380 = vmatprep.mubr.bf16.mxu0 0
        %1381 = vmatmul.mubr.bf16.gmra.mrb[0].mxu0 %v760
        %v1382 = vpop.f32.mrb[0].mxu0
        %v1383 = vadd.f32 %v669, %v1382
        %v1384 = vpop.f32.mrb[0].mxu0
        %v1385 = vpop.f32.mrb[0].mxu0
        %v1386 = vadd.f32 %v674, %v1385
        %v1387 = vpop.f32.mrb[0].mxu0
        %1388 = vmatprep.mubr.bf16.mxu0 0
        %1389 = vmatmul.mubr.bf16.gmra.mrb[0].mxu0 %v763
        %v1390 = vpop.f32.mrb[0].mxu0
        %v1391 = vadd.f32 %v679, %v1390
        %v1392 = vpop.f32.mrb[0].mxu0
        %v1393 = vpop.f32.mrb[0].mxu0
        %v1394 = vadd.f32 %v684, %v1393
        %v1395 = vpop.f32.mrb[0].mxu0
        %1396 = vmatprep.mubr.bf16.mxu0 0
        %1397 = vmatmul.mubr.bf16.gmra.mrb[0].mxu0 %v766
        %v1398 = vpop.f32.mrb[0].mxu0
        %v1399 = vadd.f32 %v689, %v1398
        %v1400 = vpop.f32.mrb[0].mxu0
        %v1401 = vpop.f32.mrb[0].mxu0
        %v1402 = vadd.f32 %v694, %v1401
        %v1403 = vpop.f32.mrb[0].mxu0
        %1404 = vmatprep.mubr.bf16.mxu0 0
        %1405 = vmatmul.mubr.bf16.gmra.mrb[0].mxu0 %v769
        %v1406 = vpop.f32.mrb[0].mxu0
        %v1407 = vadd.f32 %v699, %v1406
        %v1408 = vpop.f32.mrb[0].mxu0
        %v1409 = vpop.f32.mrb[0].mxu0
        %v1410 = vadd.f32 %v704, %v1409
        %v1411 = vpop.f32.mrb[0].mxu0
        %1412 = vdwg.mxu0
        %v1413 = vmul.f32 %v1351, 0.5
        %v1414 = vmul.f32 %v1354, 0.5
        %v1415 = vmul.f32 %v1359, 0.5
        %v1416 = vmul.f32 %v1362, 0.5
        %v1417 = vmul.f32 %v1367, 0.5
        %v1418 = vmul.f32 %v1370, 0.5
        %v1419 = vmul.f32 %v1375, 0.5
        %v1420 = vmul.f32 %v1378, 0.5
        %v1421 = vmul.f32 %v1383, 0.5
        %v1422 = vmul.f32 %v1386, 0.5
        %v1423 = vmul.f32 %v1391, 0.5
        %v1424 = vmul.f32 %v1394, 0.5
        %v1425 = vmul.f32 %v1399, 0.5
        %v1426 = vmul.f32 %v1402, 0.5
        %v1427 = vmul.f32 %v1407, 0.5
        %v1428 = vmul.f32 %v1410, 0.5
        %v1429 = vmul.f32 %v1351, 0.70710677
        %v1430 = vmul.f32 %v1354, 0.70710677
        %v1431 = vmul.f32 %v1359, 0.70710677
        %v1432 = vmul.f32 %v1362, 0.70710677
        %v1433 = vmul.f32 %v1367, 0.70710677
        %v1434 = vmul.f32 %v1370, 0.70710677
        %v1435 = vmul.f32 %v1375, 0.70710677
        %v1436 = vmul.f32 %v1378, 0.70710677
        %v1437 = vmul.f32 %v1383, 0.70710677
        %v1438 = vmul.f32 %v1386, 0.70710677
        %v1439 = vmul.f32 %v1391, 0.70710677
        %v1440 = vmul.f32 %v1394, 0.70710677
        %v1441 = vmul.f32 %v1399, 0.70710677
        %v1442 = vmul.f32 %v1402, 0.70710677
        %v1443 = vmul.f32 %v1407, 0.70710677
        %v1444 = vmul.f32 %v1410, 0.70710677
        %v1445 = verf.f32.pop %v1429
        %v1446 = verf.f32.pop %v1430
        %v1447 = verf.f32.pop %v1431
        %v1448 = verf.f32.pop %v1432
        %v1449 = verf.f32.pop %v1433
        %v1450 = verf.f32.pop %v1434
        %v1451 = verf.f32.pop %v1435
        %v1452 = verf.f32.pop %v1436
        %v1453 = verf.f32.pop %v1437
        %v1454 = verf.f32.pop %v1438
        %v1455 = verf.f32.pop %v1439
        %v1456 = verf.f32.pop %v1440
        %v1457 = verf.f32.pop %v1441
        %v1458 = verf.f32.pop %v1442
        %v1459 = verf.f32.pop %v1443
        %v1460 = verf.f32.pop %v1444
        %v1461 = vadd.f32 %v1445, 1.0
        %v1462 = vadd.f32 %v1446, 1.0
        %v1463 = vadd.f32 %v1447, 1.0
        %v1464 = vadd.f32 %v1448, 1.0
        %v1465 = vadd.f32 %v1449, 1.0
        %v1466 = vadd.f32 %v1450, 1.0
        %v1467 = vadd.f32 %v1451, 1.0
        %v1468 = vadd.f32 %v1452, 1.0
        %v1469 = vadd.f32 %v1453, 1.0
        %v1470 = vadd.f32 %v1454, 1.0
        %v1471 = vadd.f32 %v1455, 1.0
        %v1472 = vadd.f32 %v1456, 1.0
        %v1473 = vadd.f32 %v1457, 1.0
        %v1474 = vadd.f32 %v1458, 1.0
        %v1475 = vadd.f32 %v1459, 1.0
        %v1476 = vadd.f32 %v1460, 1.0
        %v1477 = vmul.f32 %v1413, %v1461
        %v1478 = vmul.f32 %v1414, %v1462
        %v1479 = vmul.f32 %v1415, %v1463
        %v1480 = vmul.f32 %v1416, %v1464
        %v1481 = vmul.f32 %v1417, %v1465
        %v1482 = vmul.f32 %v1418, %v1466
        %v1483 = vmul.f32 %v1419, %v1467
        %v1484 = vmul.f32 %v1420, %v1468
        %v1485 = vmul.f32 %v1421, %v1469
        %v1486 = vmul.f32 %v1422, %v1470
        %v1487 = vmul.f32 %v1423, %v1471
        %v1488 = vmul.f32 %v1424, %v1472
        %v1489 = vmul.f32 %v1425, %v1473
        %v1490 = vmul.f32 %v1426, %v1474
        %v1491 = vmul.f32 %v1427, %v1475
        %v1492 = vmul.f32 %v1428, %v1476
        %v1493 = vpack.c.bf16 %v1478, %v1477
        %v1494 = vpack.c.bf16 %v1480, %v1479
        %v1495 = vpack.c.bf16 %v1482, %v1481
        %v1496 = vpack.c.bf16 %v1484, %v1483
        %v1497 = vpack.c.bf16 %v1486, %v1485
        %v1498 = vpack.c.bf16 %v1488, %v1487
        %v1499 = vpack.c.bf16 %v1490, %v1489
        %v1500 = vpack.c.bf16 %v1492, %v1491
        %1501 = vmatprep.subr.bf16.mxu0 0
        %1502 = vmatpush1.bf16.msra.mxu0 %v1493
        %1503 = vmatprep.subr.bf16.mxu0 0
        %1504 = vmatpush1.bf16.msra.mxu0 %v1494
        %1505 = vmatprep.subr.bf16.mxu0 0
        %1506 = vmatpush1.bf16.msra.mxu0 %v1495
        %1507 = vmatprep.subr.bf16.mxu0 0
        %1508 = vmatpush1.bf16.msra.mxu0 %v1496
        %1509 = vmatprep.subr.bf16.mxu0 0
        %1510 = vmatpush1.bf16.msra.mxu0 %v1497
        %1511 = vmatprep.subr.bf16.mxu0 0
        %1512 = vmatpush1.bf16.msra.mxu0 %v1498
        %1513 = vmatprep.subr.bf16.mxu0 0
        %1514 = vmatpush1.bf16.msra.mxu0 %v1499
        %1515 = vmatprep.subr.bf16.mxu0 0
        %1516 = vmatpush1.bf16.msra.mxu0 %v1500
        %1517 = vmatprep.subr.bf16.mxu0 0
        %1518 = vmatpush1.bf16.msra.mxu0 0
        %1519 = vmatprep.subr.bf16.mxu0 0
        %1520 = vmatpush1.bf16.msra.mxu0 0
        %1521 = vmatprep.subr.bf16.mxu0 0
        %1522 = vmatpush1.bf16.msra.mxu0 0
        %1523 = vmatprep.subr.bf16.mxu0 0
        %1524 = vmatpush1.bf16.msra.mxu0 0
        %1525 = vmatprep.subr.bf16.mxu0 0
        %1526 = vmatpush1.bf16.msra.mxu0 0
        %1527 = vmatprep.subr.bf16.mxu0 0
        %1528 = vmatpush1.bf16.msra.mxu0 0
        %1529 = vmatprep.subr.bf16.mxu0 0
        %1530 = vmatpush1.bf16.msra.mxu0 0
        %1531 = vmatprep.subr.bf16.mxu0 0
        %1532 = vmatpush1.bf16.msra.mxu0 0
        %1533 = vmatprep.mubr.bf16.mxu0 0
        %1534 = vmatmul.mubr.bf16.gmra.mrb[0].mxu0 %v970
        %v1535 = vpop.f32.mrb[0].mxu0
        %v1536 = vadd.f32 %v959, %v1535
        %v1537 = vpop.f32.mrb[0].mxu0
        %v1538 = vpop.f32.mrb[0].mxu0
        %v1539 = vadd.f32 %v964, %v1538
        %v1540 = vpop.f32.mrb[0].mxu0
        %1541 = vdwg.mxu0
        %v1542 = vmul.f32 %v1536, %v591
        %v1543 = vmul.f32 %v1539, %v591
        %v1544 = vadd.f32 %v1285, %v1542
        %v1545 = vadd.f32 %v1286, %v1543
        %s1546 = scalar_lea.vmem %s528, 32 [#allocation11]
        %1547 = vst [vmem:[%s1546] sm:$0xff] %v1544
        %1548 = vst [vmem:[%s1546 + $0x8] sm:$0xff] %v1545
        %s1549 = scalar_lea.vmem %s534, 48
        %v1550 = vld [vmem:[%s1549] sm:$0xff]
        %v1551 = vld [vmem:[%s1549 + $0x8] sm:$0xff]
        %1552 = vadd.xlane.f32.xlu0 %v1550
        %v1553 = vpop.xlane.xlu0 %1552
        %1554 = vadd.xlane.f32.xlu0 %v1551
        %v1555 = vpop.xlane.xlu0 %1554
        %v1556 = vmul.f32 %v1553, 0.03125
        %v1557 = vmul.f32 %v1555, 0.03125
        %v1558 = vsub.f32 %v1550, %v1556
        %v1559 = vsub.f32 %v1551, %v1557
        %v1560 = vmul.f32 %v1558, %v591
        %v1561 = vmul.f32 %v1559, %v591
        %v1562 = vmul.f32 %v1560, %v1560
        %v1563 = vmul.f32 %v1561, %v1561
        %1564 = vadd.xlane.f32.xlu0 %v1562
        %v1565 = vpop.xlane.xlu0 %1564
        %1566 = vadd.xlane.f32.xlu0 %v1563
        %v1567 = vpop.xlane.xlu0 %1566
        %v1568 = vmul.f32 %v1565, 0.03125
        %v1569 = vmul.f32 %v1567, 0.03125
        %v1570 = vadd.f32 %v1568, 1e-05
        %v1571 = vadd.f32 %v1569, 1e-05
        %v1572 = vrsqrt.pop %v1570
        %v1573 = vrsqrt.pop %v1571
        %v1574 = vmul.f32 %v1560, %v1572
        %v1575 = vmul.f32 %v1561, %v1573
        %v1576 = vmul.f32 %v1574, %v613
        %v1577 = vmul.f32 %v1575, %v613
        %v1578 = vadd.f32 %v1576, %v621
        %v1579 = vadd.f32 %v1577, %v621
        %v1580 = vpack.c.bf16 %v1579, %v1578
        %1581 = vmatprep.subr.bf16.mxu0 0
        %1582 = vmatpush1.bf16.msra.mxu0 %v1580
        %1583 = vmatprep.subr.bf16.mxu0 0
        %1584 = vmatpush1.bf16.msra.mxu0 0
        %1585 = vmatprep.subr.bf16.mxu0 0
        %1586 = vmatpush1.bf16.msra.mxu0 0
        %1587 = vmatprep.subr.bf16.mxu0 0
        %1588 = vmatpush1.bf16.msra.mxu0 0
        %1589 = vmatprep.subr.bf16.mxu0 0
        %1590 = vmatpush1.bf16.msra.mxu0 0
        %1591 = vmatprep.subr.bf16.mxu0 0
        %1592 = vmatpush1.bf16.msra.mxu0 0
        %1593 = vmatprep.subr.bf16.mxu0 0
        %1594 = vmatpush1.bf16.msra.mxu0 0
        %1595 = vmatprep.subr.bf16.mxu0 0
        %1596 = vmatpush1.bf16.msra.mxu0 0
        %1597 = vmatprep.subr.bf16.mxu0 0
        %1598 = vmatpush1.bf16.msra.mxu0 0
        %1599 = vmatprep.subr.bf16.mxu0 0
        %1600 = vmatpush1.bf16.msra.mxu0 0
        %1601 = vmatprep.subr.bf16.mxu0 0
        %1602 = vmatpush1.bf16.msra.mxu0 0
        %1603 = vmatprep.subr.bf16.mxu0 0
        %1604 = vmatpush1.bf16.msra.mxu0 0
        %1605 = vmatprep.subr.bf16.mxu0 0
        %1606 = vmatpush1.bf16.msra.mxu0 0
        %1607 = vmatprep.subr.bf16.mxu0 0
        %1608 = vmatpush1.bf16.msra.mxu0 0
        %1609 = vmatprep.subr.bf16.mxu0 0
        %1610 = vmatpush1.bf16.msra.mxu0 0
        %1611 = vmatprep.subr.bf16.mxu0 0
        %1612 = vmatpush1.bf16.msra.mxu0 0
        %1613 = vmatprep.mubr.bf16.mxu0 0
        %1614 = vmatmul.mubr.bf16.gmra.mrb[0].mxu0 %v748
        %v1615 = vpop.f32.mrb[0].mxu0
        %v1616 = vadd.f32 %v629, %v1615
        %v1617 = vpop.f32.mrb[0].mxu0
        %v1618 = vpop.f32.mrb[0].mxu0
        %v1619 = vadd.f32 %v634, %v1618
        %v1620 = vpop.f32.mrb[0].mxu0
        %1621 = vmatprep.mubr.bf16.mxu0 0
        %1622 = vmatmul.mubr.bf16.gmra.mrb[0].mxu0 %v751
        %v1623 = vpop.f32.mrb[0].mxu0
        %v1624 = vadd.f32 %v639, %v1623
        %v1625 = vpop.f32.mrb[0].mxu0
        %v1626 = vpop.f32.mrb[0].mxu0
        %v1627 = vadd.f32 %v644, %v1626
        %v1628 = vpop.f32.mrb[0].mxu0
        %1629 = vmatprep.mubr.bf16.mxu0 0
        %1630 = vmatmul.mubr.bf16.gmra.mrb[0].mxu0 %v754
        %v1631 = vpop.f32.mrb[0].mxu0
        %v1632 = vadd.f32 %v649, %v1631
        %v1633 = vpop.f32.mrb[0].mxu0
        %v1634 = vpop.f32.mrb[0].mxu0
        %v1635 = vadd.f32 %v654, %v1634
        %v1636 = vpop.f32.mrb[0].mxu0
        %1637 = vmatprep.mubr.bf16.mxu0 0
        %1638 = vmatmul.mubr.bf16.gmra.mrb[0].mxu0 %v757
        %v1639 = vpop.f32.mrb[0].mxu0
        %v1640 = vadd.f32 %v659, %v1639
        %v1641 = vpop.f32.mrb[0].mxu0
        %v1642 = vpop.f32.mrb[0].mxu0
        %v1643 = vadd.f32 %v664, %v1642
        %v1644 = vpop.f32.mrb[0].mxu0
        %1645 = vmatprep.mubr.bf16.mxu0 0
        %1646 = vmatmul.mubr.bf16.gmra.mrb[0].mxu0 %v760
        %v1647 = vpop.f32.mrb[0].mxu0
        %v1648 = vadd.f32 %v669, %v1647
        %v1649 = vpop.f32.mrb[0].mxu0
        %v1650 = vpop.f32.mrb[0].mxu0
        %v1651 = vadd.f32 %v674, %v1650
        %v1652 = vpop.f32.mrb[0].mxu0
        %1653 = vmatprep.mubr.bf16.mxu0 0
        %1654 = vmatmul.mubr.bf16.gmra.mrb[0].mxu0 %v763
        %v1655 = vpop.f32.mrb[0].mxu0
        %v1656 = vadd.f32 %v679, %v1655
        %v1657 = vpop.f32.mrb[0].mxu0
        %v1658 = vpop.f32.mrb[0].mxu0
        %v1659 = vadd.f32 %v684, %v1658
        %v1660 = vpop.f32.mrb[0].mxu0
        %1661 = vmatprep.mubr.bf16.mxu0 0
        %1662 = vmatmul.mubr.bf16.gmra.mrb[0].mxu0 %v766
        %v1663 = vpop.f32.mrb[0].mxu0
        %v1664 = vadd.f32 %v689, %v1663
        %v1665 = vpop.f32.mrb[0].mxu0
        %v1666 = vpop.f32.mrb[0].mxu0
        %v1667 = vadd.f32 %v694, %v1666
        %v1668 = vpop.f32.mrb[0].mxu0
        %1669 = vmatprep.mubr.bf16.mxu0 0
        %1670 = vmatmul.mubr.bf16.gmra.mrb[0].mxu0 %v769
        %v1671 = vpop.f32.mrb[0].mxu0
        %v1672 = vadd.f32 %v699, %v1671
        %v1673 = vpop.f32.mrb[0].mxu0
        %v1674 = vpop.f32.mrb[0].mxu0
        %v1675 = vadd.f32 %v704, %v1674
        %v1676 = vpop.f32.mrb[0].mxu0
        %1677 = vdwg.mxu0
        %v1678 = vmul.f32 %v1616, 0.5
        %v1679 = vmul.f32 %v1619, 0.5
        %v1680 = vmul.f32 %v1624, 0.5
        %v1681 = vmul.f32 %v1627, 0.5
        %v1682 = vmul.f32 %v1632, 0.5
        %v1683 = vmul.f32 %v1635, 0.5
        %v1684 = vmul.f32 %v1640, 0.5
        %v1685 = vmul.f32 %v1643, 0.5
        %v1686 = vmul.f32 %v1648, 0.5
        %v1687 = vmul.f32 %v1651, 0.5
        %v1688 = vmul.f32 %v1656, 0.5
        %v1689 = vmul.f32 %v1659, 0.5
        %v1690 = vmul.f32 %v1664, 0.5
        %v1691 = vmul.f32 %v1667, 0.5
        %v1692 = vmul.f32 %v1672, 0.5
        %v1693 = vmul.f32 %v1675, 0.5
        %v1694 = vmul.f32 %v1616, 0.70710677
        %v1695 = vmul.f32 %v1619, 0.70710677
        %v1696 = vmul.f32 %v1624, 0.70710677
        %v1697 = vmul.f32 %v1627, 0.70710677
        %v1698 = vmul.f32 %v1632, 0.70710677
        %v1699 = vmul.f32 %v1635, 0.70710677
        %v1700 = vmul.f32 %v1640, 0.70710677
        %v1701 = vmul.f32 %v1643, 0.70710677
        %v1702 = vmul.f32 %v1648, 0.70710677
        %v1703 = vmul.f32 %v1651, 0.70710677
        %v1704 = vmul.f32 %v1656, 0.70710677
        %v1705 = vmul.f32 %v1659, 0.70710677
        %v1706 = vmul.f32 %v1664, 0.70710677
        %v1707 = vmul.f32 %v1667, 0.70710677
        %v1708 = vmul.f32 %v1672, 0.70710677
        %v1709 = vmul.f32 %v1675, 0.70710677
        %v1710 = verf.f32.pop %v1694
        %v1711 = verf.f32.pop %v1695
        %v1712 = verf.f32.pop %v1696
        %v1713 = verf.f32.pop %v1697
        %v1714 = verf.f32.pop %v1698
        %v1715 = verf.f32.pop %v1699
        %v1716 = verf.f32.pop %v1700
        %v1717 = verf.f32.pop %v1701
        %v1718 = verf.f32.pop %v1702
        %v1719 = verf.f32.pop %v1703
        %v1720 = verf.f32.pop %v1704
        %v1721 = verf.f32.pop %v1705
        %v1722 = verf.f32.pop %v1706
        %v1723 = verf.f32.pop %v1707
        %v1724 = verf.f32.pop %v1708
        %v1725 = verf.f32.pop %v1709
        %v1726 = vadd.f32 %v1710, 1.0
        %v1727 = vadd.f32 %v1711, 1.0
        %v1728 = vadd.f32 %v1712, 1.0
        %v1729 = vadd.f32 %v1713, 1.0
        %v1730 = vadd.f32 %v1714, 1.0
        %v1731 = vadd.f32 %v1715, 1.0
        %v1732 = vadd.f32 %v1716, 1.0
        %v1733 = vadd.f32 %v1717, 1.0
        %v1734 = vadd.f32 %v1718, 1.0
        %v1735 = vadd.f32 %v1719, 1.0
        %v1736 = vadd.f32 %v1720, 1.0
        %v1737 = vadd.f32 %v1721, 1.0
        %v1738 = vadd.f32 %v1722, 1.0
        %v1739 = vadd.f32 %v1723, 1.0
        %v1740 = vadd.f32 %v1724, 1.0
        %v1741 = vadd.f32 %v1725, 1.0
        %v1742 = vmul.f32 %v1678, %v1726
        %v1743 = vmul.f32 %v1679, %v1727
        %v1744 = vmul.f32 %v1680, %v1728
        %v1745 = vmul.f32 %v1681, %v1729
        %v1746 = vmul.f32 %v1682, %v1730
        %v1747 = vmul.f32 %v1683, %v1731
        %v1748 = vmul.f32 %v1684, %v1732
        %v1749 = vmul.f32 %v1685, %v1733
        %v1750 = vmul.f32 %v1686, %v1734
        %v1751 = vmul.f32 %v1687, %v1735
        %v1752 = vmul.f32 %v1688, %v1736
        %v1753 = vmul.f32 %v1689, %v1737
        %v1754 = vmul.f32 %v1690, %v1738
        %v1755 = vmul.f32 %v1691, %v1739
        %v1756 = vmul.f32 %v1692, %v1740
        %v1757 = vmul.f32 %v1693, %v1741
        %v1758 = vpack.c.bf16 %v1743, %v1742
        %v1759 = vpack.c.bf16 %v1745, %v1744
        %v1760 = vpack.c.bf16 %v1747, %v1746
        %v1761 = vpack.c.bf16 %v1749, %v1748
        %v1762 = vpack.c.bf16 %v1751, %v1750
        %v1763 = vpack.c.bf16 %v1753, %v1752
        %v1764 = vpack.c.bf16 %v1755, %v1754
        %v1765 = vpack.c.bf16 %v1757, %v1756
        %1766 = vmatprep.subr.bf16.mxu0 0
        %1767 = vmatpush1.bf16.msra.mxu0 %v1758
        %1768 = vmatprep.subr.bf16.mxu0 0
        %1769 = vmatpush1.bf16.msra.mxu0 %v1759
        %1770 = vmatprep.subr.bf16.mxu0 0
        %1771 = vmatpush1.bf16.msra.mxu0 %v1760
        %1772 = vmatprep.subr.bf16.mxu0 0
        %1773 = vmatpush1.bf16.msra.mxu0 %v1761
        %1774 = vmatprep.subr.bf16.mxu0 0
        %1775 = vmatpush1.bf16.msra.mxu0 %v1762
        %1776 = vmatprep.subr.bf16.mxu0 0
        %1777 = vmatpush1.bf16.msra.mxu0 %v1763
        %1778 = vmatprep.subr.bf16.mxu0 0
        %1779 = vmatpush1.bf16.msra.mxu0 %v1764
        %1780 = vmatprep.subr.bf16.mxu0 0
        %1781 = vmatpush1.bf16.msra.mxu0 %v1765
        %1782 = vmatprep.subr.bf16.mxu0 0
        %1783 = vmatpush1.bf16.msra.mxu0 0
        %1784 = vmatprep.subr.bf16.mxu0 0
        %1785 = vmatpush1.bf16.msra.mxu0 0
        %1786 = vmatprep.subr.bf16.mxu0 0
        %1787 = vmatpush1.bf16.msra.mxu0 0
        %1788 = vmatprep.subr.bf16.mxu0 0
        %1789 = vmatpush1.bf16.msra.mxu0 0
        %1790 = vmatprep.subr.bf16.mxu0 0
        %1791 = vmatpush1.bf16.msra.mxu0 0
        %1792 = vmatprep.subr.bf16.mxu0 0
        %1793 = vmatpush1.bf16.msra.mxu0 0
        %1794 = vmatprep.subr.bf16.mxu0 0
        %1795 = vmatpush1.bf16.msra.mxu0 0
        %1796 = vmatprep.subr.bf16.mxu0 0
        %1797 = vmatpush1.bf16.msra.mxu0 0
        %1798 = vmatprep.mubr.bf16.mxu0 0
        %1799 = vmatmul.mubr.bf16.gmra.mrb[0].mxu0 %v970
        %v1800 = vpop.f32.mrb[0].mxu0
        %v1801 = vadd.f32 %v959, %v1800
        %v1802 = vpop.f32.mrb[0].mxu0
        %v1803 = vpop.f32.mrb[0].mxu0
        %v1804 = vadd.f32 %v964, %v1803
        %v1805 = vpop.f32.mrb[0].mxu0
        %1806 = vdwg.mxu0
        %v1807 = vmul.f32 %v1801, %v591
        %v1808 = vmul.f32 %v1804, %v591
        %v1809 = vadd.f32 %v1550, %v1807
        %v1810 = vadd.f32 %v1551, %v1808
        %s1811 = scalar_lea.vmem %s528, 48 [#allocation11]
        %1812 = vst [vmem:[%s1811] sm:$0xff] %v1809
        %1813 = vst [vmem:[%s1811 + $0x8] sm:$0xff] %v1810
        %v1814 = vld [vmem:[%s528] sm:$0xff]
        %v1815 = vld [vmem:[%s528 + $0x8] sm:$0xff]
        %v1816 = vld [vmem:[%s528 + $0x10] sm:$0xff]
        %v1817 = vld [vmem:[%s528 + $0x18] sm:$0xff]
        %v1818 = vld [vmem:[%s528 + $0x20] sm:$0xff]
        %v1819 = vld [vmem:[%s528 + $0x28] sm:$0xff]
        %v1820 = vld [vmem:[%s528 + $0x30] sm:$0xff]
        %v1821 = vld [vmem:[%s528 + $0x38] sm:$0xff]
        %v1822 = vld [vmem:[#allocation7] sm:$0x1]
        %v1823 = vld [vmem:[#allocation8] sm:$0x1]
        %1824 = vadd.xlane.f32.xlu0 %v1814
        %v1825 = vpop.xlane.xlu0 %1824
        %1826 = vadd.xlane.f32.xlu0 %v1815
        %v1827 = vpop.xlane.xlu0 %1826
        %1828 = vadd.xlane.f32.xlu0 %v1816
        %v1829 = vpop.xlane.xlu0 %1828
        %1830 = vadd.xlane.f32.xlu0 %v1817
        %v1831 = vpop.xlane.xlu0 %1830
        %1832 = vadd.xlane.f32.xlu0 %v1818
        %v1833 = vpop.xlane.xlu0 %1832
        %1834 = vadd.xlane.f32.xlu0 %v1819
        %v1835 = vpop.xlane.xlu0 %1834
        %1836 = vadd.xlane.f32.xlu0 %v1820
        %v1837 = vpop.xlane.xlu0 %1836
        %1838 = vadd.xlane.f32.xlu0 %v1821
        %v1839 = vpop.xlane.xlu0 %1838
        %v1840 = vmul.f32 %v1825, 0.03125
        %v1841 = vmul.f32 %v1827, 0.03125
        %v1842 = vmul.f32 %v1829, 0.03125
        %v1843 = vmul.f32 %v1831, 0.03125
        %v1844 = vmul.f32 %v1833, 0.03125
        %v1845 = vmul.f32 %v1835, 0.03125
        %v1846 = vmul.f32 %v1837, 0.03125
        %v1847 = vmul.f32 %v1839, 0.03125
        %v1848 = vsub.f32 %v1814, %v1840
        %v1849 = vsub.f32 %v1815, %v1841
        %v1850 = vsub.f32 %v1816, %v1842
        %v1851 = vsub.f32 %v1817, %v1843
        %v1852 = vsub.f32 %v1818, %v1844
        %v1853 = vsub.f32 %v1819, %v1845
        %v1854 = vsub.f32 %v1820, %v1846
        %v1855 = vsub.f32 %v1821, %v1847
        %v1856 = vmul.f32 %v1848, %v591
        %v1857 = vmul.f32 %v1849, %v591
        %v1858 = vmul.f32 %v1850, %v591
        %v1859 = vmul.f32 %v1851, %v591
        %v1860 = vmul.f32 %v1852, %v591
        %v1861 = vmul.f32 %v1853, %v591
        %v1862 = vmul.f32 %v1854, %v591
        %v1863 = vmul.f32 %v1855, %v591
        %v1864 = vmul.f32 %v1856, %v1856
        %v1865 = vmul.f32 %v1857, %v1857
        %v1866 = vmul.f32 %v1858, %v1858
        %v1867 = vmul.f32 %v1859, %v1859
        %v1868 = vmul.f32 %v1860, %v1860
        %v1869 = vmul.f32 %v1861, %v1861
        %v1870 = vmul.f32 %v1862, %v1862
        %v1871 = vmul.f32 %v1863, %v1863
        %1872 = vadd.xlane.f32.xlu0 %v1864
        %v1873 = vpop.xlane.xlu0 %1872
        %1874 = vadd.xlane.f32.xlu0 %v1865
        %v1875 = vpop.xlane.xlu0 %1874
        %1876 = vadd.xlane.f32.xlu0 %v1866
        %v1877 = vpop.xlane.xlu0 %1876
        %1878 = vadd.xlane.f32.xlu0 %v1867
        %v1879 = vpop.xlane.xlu0 %1878
        %1880 = vadd.xlane.f32.xlu0 %v1868
        %v1881 = vpop.xlane.xlu0 %1880
        %1882 = vadd.xlane.f32.xlu0 %v1869
        %v1883 = vpop.xlane.xlu0 %1882
        %1884 = vadd.xlane.f32.xlu0 %v1870
        %v1885 = vpop.xlane.xlu0 %1884
        %1886 = vadd.xlane.f32.xlu0 %v1871
        %v1887 = vpop.xlane.xlu0 %1886
        %v1888 = vmul.f32 %v1873, 0.03125
        %v1889 = vmul.f32 %v1875, 0.03125
        %v1890 = vmul.f32 %v1877, 0.03125
        %v1891 = vmul.f32 %v1879, 0.03125
        %v1892 = vmul.f32 %v1881, 0.03125
        %v1893 = vmul.f32 %v1883, 0.03125
        %v1894 = vmul.f32 %v1885, 0.03125
        %v1895 = vmul.f32 %v1887, 0.03125
        %v1896 = vadd.f32 %v1888, 1e-05
        %v1897 = vadd.f32 %v1889, 1e-05
        %v1898 = vadd.f32 %v1890, 1e-05
        %v1899 = vadd.f32 %v1891, 1e-05
        %v1900 = vadd.f32 %v1892, 1e-05
        %v1901 = vadd.f32 %v1893, 1e-05
        %v1902 = vadd.f32 %v1894, 1e-05
        %v1903 = vadd.f32 %v1895, 1e-05
        %v1904 = vrsqrt.pop %v1896
        %v1905 = vrsqrt.pop %v1897
        %v1906 = vrsqrt.pop %v1898
        %v1907 = vrsqrt.pop %v1899
        %v1908 = vrsqrt.pop %v1900
        %v1909 = vrsqrt.pop %v1901
        %v1910 = vrsqrt.pop %v1902
        %v1911 = vrsqrt.pop %v1903
        %v1912 = vmul.f32 %v1856, %v1904
        %v1913 = vmul.f32 %v1857, %v1905
        %v1914 = vmul.f32 %v1858, %v1906
        %v1915 = vmul.f32 %v1859, %v1907
        %v1916 = vmul.f32 %v1860, %v1908
        %v1917 = vmul.f32 %v1861, %v1909
        %v1918 = vmul.f32 %v1862, %v1910
        %v1919 = vmul.f32 %v1863, %v1911
        %v1921 = vlaneseq
        %v1922 = vshrl.u32 %v1921, 7
        %v1923 = vsub.s32 0, %v1922
        %v1924 = vrot.slane %v1822, %v1923
        %v1926 = vmul.f32 %v1912, %v1924
        %v1927 = vmul.f32 %v1913, %v1924
        %v1928 = vmul.f32 %v1914, %v1924
        %v1929 = vmul.f32 %v1915, %v1924
        %v1930 = vmul.f32 %v1916, %v1924
        %v1931 = vmul.f32 %v1917, %v1924
        %v1932 = vmul.f32 %v1918, %v1924
        %v1933 = vmul.f32 %v1919, %v1924
        %v1935 = vlaneseq
        %v1936 = vshrl.u32 %v1935, 7
        %v1937 = vsub.s32 0, %v1936
        %v1938 = vrot.slane %v1823, %v1937
        %v1940 = vadd.f32 %v1926, %v1938
        %v1941 = vadd.f32 %v1927, %v1938
        %v1942 = vadd.f32 %v1928, %v1938
        %v1943 = vadd.f32 %v1929, %v1938
        %v1944 = vadd.f32 %v1930, %v1938
        %v1945 = vadd.f32 %v1931, %v1938
        %v1946 = vadd.f32 %v1932, %v1938
        %v1947 = vadd.f32 %v1933, %v1938
        %v1948 = vpack.c.bf16 %v1941, %v1940
        %v1949 = vpack.c.bf16 %v1943, %v1942
        %v1950 = vpack.c.bf16 %v1945, %v1944
        %v1951 = vpack.c.bf16 %v1947, %v1946
        %v1952 = vld [vmem:[%s10] sm:$0xf]
        %v1953 = vld [vmem:[%s10 + $0x4] sm:$0xf]
        %v1954 = vld [vmem:[%s10 + $0x8] sm:$0xf]
        %v1955 = vld [vmem:[%s10 + $0xc] sm:$0xf]
        %v1956 = vld [vmem:[%s10 + $0x10] sm:$0xf]
        %v1957 = vld [vmem:[%s10 + $0x14] sm:$0xf]
        %v1958 = vld [vmem:[%s10 + $0x18] sm:$0xf]
        %v1959 = vld [vmem:[%s10 + $0x1c] sm:$0xf]
        %v1960 = vld [vmem:[%s10 + $0x20] sm:$0xf]
        %v1961 = vld [vmem:[%s10 + $0x24] sm:$0xf]
        %v1962 = vld [vmem:[%s10 + $0x28] sm:$0xf]
        %v1963 = vld [vmem:[%s10 + $0x2c] sm:$0xf]
        %v1964 = vld [vmem:[%s10 + $0x30] sm:$0xf]
        %v1965 = vld [vmem:[%s10 + $0x34] sm:$0xf]
        %v1966 = vld [vmem:[%s10 + $0x38] sm:$0xf]
        %v1967 = vld [vmem:[%s10 + $0x3c] sm:$0xf]
        %v1968 = vld [vmem:[#allocation10] sm:$0x1]
        %v1970 = vlaneseq
        %v1971 = vshrl.u32 %v1970, 7
        %v1972 = vsub.s32 0, %v1971
        %v1973 = vrot.slane %v1968, %v1972
        %v1991 = vunpack.c.l.b16 %v1952
        %v1992 = vunpack.c.l.b16 %v1953
        %v1993 = vunpack.c.l.b16 %v1954
        %v1994 = vunpack.c.l.b16 %v1955
        %v1995 = vunpack.c.l.b16 %v1956
        %v1996 = vunpack.c.l.b16 %v1957
        %v1997 = vunpack.c.l.b16 %v1958
        %v1998 = vunpack.c.l.b16 %v1959
        %v1999 = vunpack.c.l.b16 %v1960
        %v2000 = vunpack.c.l.b16 %v1961
        %v2001 = vunpack.c.l.b16 %v1962
        %v2002 = vunpack.c.l.b16 %v1963
        %v2003 = vunpack.c.l.b16 %v1964
        %v2004 = vunpack.c.l.b16 %v1965
        %v2005 = vunpack.c.l.b16 %v1966
        %v2006 = vunpack.c.l.b16 %v1967
        %v2007 = vpack.c.b16 %v1992, %v1991
        %v2008 = vpack.c.b16 %v1994, %v1993
        %v2009 = vpack.c.b16 %v1996, %v1995
        %v2010 = vpack.c.b16 %v1998, %v1997
        %v2011 = vpack.c.b16 %v2000, %v1999
        %v2012 = vpack.c.b16 %v2002, %v2001
        %v2013 = vpack.c.b16 %v2004, %v2003
        %v2014 = vpack.c.b16 %v2006, %v2005
        %2023 = vmatprep.subr.bf16.mxu0 0
        %2024 = vmatpush1.bf16.msra.mxu0 %v2007
        %2025 = vmatprep.subr.bf16.mxu0 0
        %2026 = vmatpush1.bf16.msra.mxu0 %v2008
        %2027 = vmatprep.subr.bf16.mxu0 0
        %2028 = vmatpush1.bf16.msra.mxu0 %v2009
        %2029 = vmatprep.subr.bf16.mxu0 0
        %2030 = vmatpush1.bf16.msra.mxu0 %v2010
        %2031 = vmatprep.subr.bf16.mxu0 0
        %2032 = vmatpush1.bf16.msra.mxu0 %v2011
        %2033 = vmatprep.subr.bf16.mxu0 0
        %2034 = vmatpush1.bf16.msra.mxu0 %v2012
        %2035 = vmatprep.subr.bf16.mxu0 0
        %2036 = vmatpush1.bf16.msra.mxu0 %v2013
        %2037 = vmatprep.subr.bf16.mxu0 0
        %2038 = vmatpush1.bf16.msra.mxu0 %v2014
        %2039 = vmatprep.subr.bf16.mxu0 0
        %2040 = vmatpush1.bf16.msra.mxu0 0
        %2041 = vmatprep.subr.bf16.mxu0 0
        %2042 = vmatpush1.bf16.msra.mxu0 0
        %2043 = vmatprep.subr.bf16.mxu0 0
        %2044 = vmatpush1.bf16.msra.mxu0 0
        %2045 = vmatprep.subr.bf16.mxu0 0
        %2046 = vmatpush1.bf16.msra.mxu0 0
        %2047 = vmatprep.subr.bf16.mxu0 0
        %2048 = vmatpush1.bf16.msra.mxu0 0
        %2049 = vmatprep.subr.bf16.mxu0 0
        %2050 = vmatpush1.bf16.msra.mxu0 0
        %2051 = vmatprep.subr.bf16.mxu0 0
        %2052 = vmatpush1.bf16.msra.mxu0 0
        %2053 = vmatprep.subr.bf16.mxu0 0
        %2054 = vmatpush1.bf16.msra.mxu0 0
        %2055 = vmatprep.mubr.bf16.mxu0 0
        %2056 = vmatmul.mubr.bf16.gmra.mrb[0].mxu0 %v1948
        %v2057 = vpop.f32.mrb[0].mxu0
        %v2058 = vadd.f32 %v1973, %v2057
        %v2059 = vpop.f32.mrb[0].mxu0
        %v2060 = vpop.f32.mrb[0].mxu0
        %v2061 = vadd.f32 %v1973, %v2060
        %v2062 = vpop.f32.mrb[0].mxu0
        %2063 = vmatprep.mubr.bf16.mxu0 0
        %2064 = vmatmul.mubr.bf16.gmra.mrb[0].mxu0 %v1949
        %v2065 = vpop.f32.mrb[0].mxu0
        %v2066 = vadd.f32 %v1973, %v2065
        %v2067 = vpop.f32.mrb[0].mxu0
        %v2068 = vpop.f32.mrb[0].mxu0
        %v2069 = vadd.f32 %v1973, %v2068
        %v2070 = vpop.f32.mrb[0].mxu0
        %2071 = vmatprep.mubr.bf16.mxu0 0
        %2072 = vmatmul.mubr.bf16.gmra.mrb[0].mxu0 %v1950
        %v2073 = vpop.f32.mrb[0].mxu0
        %v2074 = vadd.f32 %v1973, %v2073
        %v2075 = vpop.f32.mrb[0].mxu0
        %v2076 = vpop.f32.mrb[0].mxu0
        %v2077 = vadd.f32 %v1973, %v2076
        %v2078 = vpop.f32.mrb[0].mxu0
        %2079 = vmatprep.mubr.bf16.mxu0 0
        %2080 = vmatmul.mubr.bf16.gmra.mrb[0].mxu0 %v1951
        %v2081 = vpop.f32.mrb[0].mxu0
        %v2082 = vadd.f32 %v1973, %v2081
        %v2083 = vpop.f32.mrb[0].mxu0
        %v2084 = vpop.f32.mrb[0].mxu0
        %v2085 = vadd.f32 %v1973, %v2084
        %v2086 = vpop.f32.mrb[0].mxu0
        %2087 = vdwg.mxu0
        %v2088 = vmul.f32 %v2058, 0.5
        %v2089 = vmul.f32 %v2061, 0.5
        %v2090 = vmul.f32 %v2066, 0.5
        %v2091 = vmul.f32 %v2069, 0.5
        %v2092 = vmul.f32 %v2074, 0.5
        %v2093 = vmul.f32 %v2077, 0.5
        %v2094 = vmul.f32 %v2082, 0.5
        %v2095 = vmul.f32 %v2085, 0.5
        %v2096 = vmul.f32 %v2058, 0.70710677
        %v2097 = vmul.f32 %v2061, 0.70710677
        %v2098 = vmul.f32 %v2066, 0.70710677
        %v2099 = vmul.f32 %v2069, 0.70710677
        %v2100 = vmul.f32 %v2074, 0.70710677
        %v2101 = vmul.f32 %v2077, 0.70710677
        %v2102 = vmul.f32 %v2082, 0.70710677
        %v2103 = vmul.f32 %v2085, 0.70710677
        %v2104 = verf.f32.pop %v2096
        %v2105 = verf.f32.pop %v2097
        %v2106 = verf.f32.pop %v2098
        %v2107 = verf.f32.pop %v2099
        %v2108 = verf.f32.pop %v2100
        %v2109 = verf.f32.pop %v2101
        %v2110 = verf.f32.pop %v2102
        %v2111 = verf.f32.pop %v2103
        %v2112 = vadd.f32 %v2104, 1.0
        %v2113 = vadd.f32 %v2105, 1.0
        %v2114 = vadd.f32 %v2106, 1.0
        %v2115 = vadd.f32 %v2107, 1.0
        %v2116 = vadd.f32 %v2108, 1.0
        %v2117 = vadd.f32 %v2109, 1.0
        %v2118 = vadd.f32 %v2110, 1.0
        %v2119 = vadd.f32 %v2111, 1.0
        %v2120 = vmul.f32 %v2088, %v2112
        %v2121 = vmul.f32 %v2089, %v2113
        %v2122 = vmul.f32 %v2090, %v2114
        %v2123 = vmul.f32 %v2091, %v2115
        %v2124 = vmul.f32 %v2092, %v2116
        %v2125 = vmul.f32 %v2093, %v2117
        %v2126 = vmul.f32 %v2094, %v2118
        %v2127 = vmul.f32 %v2095, %v2119
        %v2128 = vpack.c.bf16 %v2121, %v2120
        %v2129 = vpack.c.bf16 %v2123, %v2122
        %v2130 = vpack.c.bf16 %v2125, %v2124
        %v2131 = vpack.c.bf16 %v2127, %v2126
        %v2132 = vld [vmem:[%s12] sm:$0xf]
        %v2133 = vld [vmem:[%s12 + $0x4] sm:$0xf]
        %v2134 = vld [vmem:[%s12 + $0x8] sm:$0xf]
        %v2135 = vld [vmem:[%s12 + $0xc] sm:$0xf]
        %v2136 = vld [vmem:[%s12 + $0x10] sm:$0xf]
        %v2137 = vld [vmem:[%s12 + $0x14] sm:$0xf]
        %v2138 = vld [vmem:[%s12 + $0x18] sm:$0xf]
        %v2139 = vld [vmem:[%s12 + $0x1c] sm:$0xf]
        %v2140 = vld [vmem:[%s12 + $0x20] sm:$0xf]
        %v2141 = vld [vmem:[%s12 + $0x24] sm:$0xf]
        %v2142 = vld [vmem:[%s12 + $0x28] sm:$0xf]
        %v2143 = vld [vmem:[%s12 + $0x2c] sm:$0xf]
        %v2144 = vld [vmem:[%s12 + $0x30] sm:$0xf]
        %v2145 = vld [vmem:[%s12 + $0x34] sm:$0xf]
        %v2146 = vld [vmem:[%s12 + $0x38] sm:$0xf]
        %v2147 = vld [vmem:[%s12 + $0x3c] sm:$0xf]
        %v2148 = vld [vmem:[%s13] sm:$0x1]
        %v2150 = vlaneseq
        %v2151 = vshrl.u32 %v2150, 7
        %v2152 = vsub.s32 0, %v2151
        %v2153 = vrot.slane %v2148, %v2152
        %v2171 = vunpack.c.l.b16 %v2132
        %v2172 = vunpack.c.l.b16 %v2133
        %v2173 = vunpack.c.l.b16 %v2134
        %v2174 = vunpack.c.l.b16 %v2135
        %v2175 = vunpack.c.l.b16 %v2136
        %v2176 = vunpack.c.l.b16 %v2137
        %v2177 = vunpack.c.l.b16 %v2138
        %v2178 = vunpack.c.l.b16 %v2139
        %v2179 = vunpack.c.l.b16 %v2140
        %v2180 = vunpack.c.l.b16 %v2141
        %v2181 = vunpack.c.l.b16 %v2142
        %v2182 = vunpack.c.l.b16 %v2143
        %v2183 = vunpack.c.l.b16 %v2144
        %v2184 = vunpack.c.l.b16 %v2145
        %v2185 = vunpack.c.l.b16 %v2146
        %v2186 = vunpack.c.l.b16 %v2147
        %v2187 = vpack.c.b16 %v2172, %v2171
        %v2188 = vpack.c.b16 %v2174, %v2173
        %v2189 = vpack.c.b16 %v2176, %v2175
        %v2190 = vpack.c.b16 %v2178, %v2177
        %v2191 = vpack.c.b16 %v2180, %v2179
        %v2192 = vpack.c.b16 %v2182, %v2181
        %v2193 = vpack.c.b16 %v2184, %v2183
        %v2194 = vpack.c.b16 %v2186, %v2185
        %2203 = vmatprep.subr.bf16.mxu0 0
        %2204 = vmatpush1.bf16.msra.mxu0 %v2187
        %2205 = vmatprep.subr.bf16.mxu0 0
        %2206 = vmatpush1.bf16.msra.mxu0 %v2188
        %2207 = vmatprep.subr.bf16.mxu0 0
        %2208 = vmatpush1.bf16.msra.mxu0 %v2189
        %2209 = vmatprep.subr.bf16.mxu0 0
        %2210 = vmatpush1.bf16.msra.mxu0 %v2190
        %2211 = vmatprep.subr.bf16.mxu0 0
        %2212 = vmatpush1.bf16.msra.mxu0 %v2191
        %2213 = vmatprep.subr.bf16.mxu0 0
        %2214 = vmatpush1.bf16.msra.mxu0 %v2192
        %2215 = vmatprep.subr.bf16.mxu0 0
        %2216 = vmatpush1.bf16.msra.mxu0 %v2193
        %2217 = vmatprep.subr.bf16.mxu0 0
        %2218 = vmatpush1.bf16.msra.mxu0 %v2194
        %2219 = vmatprep.subr.bf16.mxu0 0
        %2220 = vmatpush1.bf16.msra.mxu0 0
        %2221 = vmatprep.subr.bf16.mxu0 0
        %2222 = vmatpush1.bf16.msra.mxu0 0
        %2223 = vmatprep.subr.bf16.mxu0 0
        %2224 = vmatpush1.bf16.msra.mxu0 0
        %2225 = vmatprep.subr.bf16.mxu0 0
        %2226 = vmatpush1.bf16.msra.mxu0 0
        %2227 = vmatprep.subr.bf16.mxu0 0
        %2228 = vmatpush1.bf16.msra.mxu0 0
        %2229 = vmatprep.subr.bf16.mxu0 0
        %2230 = vmatpush1.bf16.msra.mxu0 0
        %2231 = vmatprep.subr.bf16.mxu0 0
        %2232 = vmatpush1.bf16.msra.mxu0 0
        %2233 = vmatprep.subr.bf16.mxu0 0
        %2234 = vmatpush1.bf16.msra.mxu0 0
        %2235 = vmatprep.mubr.bf16.mxu0 0
        %2236 = vmatmul.mubr.bf16.gmra.mrb[0].mxu0 %v2128
        %v2237 = vpop.f32.mrb[0].mxu0
        %v2238 = vadd.f32 %v2153, %v2237
        %v2239 = vpop.f32.mrb[0].mxu0
        %v2240 = vpop.f32.mrb[0].mxu0
        %v2241 = vadd.f32 %v2153, %v2240
        %v2242 = vpop.f32.mrb[0].mxu0
        %2243 = vmatprep.mubr.bf16.mxu0 0
        %2244 = vmatmul.mubr.bf16.gmra.mrb[0].mxu0 %v2129
        %v2245 = vpop.f32.mrb[0].mxu0
        %v2246 = vadd.f32 %v2153, %v2245
        %v2247 = vpop.f32.mrb[0].mxu0
        %v2248 = vpop.f32.mrb[0].mxu0
        %v2249 = vadd.f32 %v2153, %v2248
        %v2250 = vpop.f32.mrb[0].mxu0
        %2251 = vmatprep.mubr.bf16.mxu0 0
        %2252 = vmatmul.mubr.bf16.gmra.mrb[0].mxu0 %v2130
        %v2253 = vpop.f32.mrb[0].mxu0
        %v2254 = vadd.f32 %v2153, %v2253
        %v2255 = vpop.f32.mrb[0].mxu0
        %v2256 = vpop.f32.mrb[0].mxu0
        %v2257 = vadd.f32 %v2153, %v2256
        %v2258 = vpop.f32.mrb[0].mxu0
        %2259 = vmatprep.mubr.bf16.mxu0 0
        %2260 = vmatmul.mubr.bf16.gmra.mrb[0].mxu0 %v2131
        %v2261 = vpop.f32.mrb[0].mxu0
        %v2262 = vadd.f32 %v2153, %v2261
        %v2263 = vpop.f32.mrb[0].mxu0
        %v2264 = vpop.f32.mrb[0].mxu0
        %v2265 = vadd.f32 %v2153, %v2264
        %v2266 = vpop.f32.mrb[0].mxu0
        %2267 = vdwg.mxu0
        %v2268 = vadd.f32 %v1814, %v2238
        %v2269 = vadd.f32 %v1815, %v2241
        %v2270 = vadd.f32 %v1816, %v2246
        %v2271 = vadd.f32 %v1817, %v2249
        %v2272 = vadd.f32 %v1818, %v2254
        %v2273 = vadd.f32 %v1819, %v2257
        %v2274 = vadd.f32 %v1820, %v2262
        %v2275 = vadd.f32 %v1821, %v2265
        %2276 = vst [vmem:[%s528] sm:$0xff] %v2268
        %2277 = vst [vmem:[%s528 + $0x8] sm:$0xff] %v2269
        %2278 = vst [vmem:[%s528 + $0x10] sm:$0xff] %v2270
        %2279 = vst [vmem:[%s528 + $0x18] sm:$0xff] %v2271
        %2280 = vst [vmem:[%s528 + $0x20] sm:$0xff] %v2272
        %2281 = vst [vmem:[%s528 + $0x28] sm:$0xff] %v2273
        %2282 = vst [vmem:[%s528 + $0x30] sm:$0xff] %v2274
        %2283 = vst [vmem:[%s528 + $0x38] sm:$0xff] %v2275
        %s2284 = sand.u32 %s338, 1
        %s2285 = scalar_lea.sflag [#allocation4], %s2284
        %s2286 = sand.u32 %s338, 1
        %s2287 = smul.addr %s2286, 64
        %s2288 = scalar_lea.vmem [#allocation11], %s2287
        // Predicated region
        $region97: #{tpu_custom_call.1} parent=75 // pred_check
          %p2289 = pneg %p348
        $region98: #{tpu_custom_call.1} parent=75 // pred_check_branch
          %2291 = sbr.rel (%p2289) target = $region100
        $region99: #{tpu_custom_call.1} parent=75 // pred_region
          %s2292 = smul.u32 4, %s31
          %s2294 = ssub.s32 1024, 1024
          %2295 = vsyncadd %s2285, %s2294
          %s2296 = smul.addr %s2292, 2
          %s2297 = smul.addr %s2296, 128
          %s2298 = scalar_lea.hbm %s14, %s2297
          %s2299 = sshll.u32 %s2288, 4
          %s2300 = int_to_ptr.vmem [resolvable:$true] %s2299
          %2305 = dma.vmem_to_hbm [thread:$0]  %s2300, 1024, %s2298, %s2285, 128, 128, 8
        $region100: #{tpu_custom_call.1} parent=75 // pred_fallthru
          _
      $region76: #{tpu_custom_call.1} parent=5 // pred_fallthru
        _
      %p2306 = scmp.le.s32.totalorder 2, %s26
      // Predicated region
      $region101: #{tpu_custom_call.1} parent=5 // pred_check
        %p2307 = pneg %p2306
      $region102: #{tpu_custom_call.1} parent=5 // pred_check_branch
        %2309 = sbr.rel (%p2307) target = $region104
      $region103: #{tpu_custom_call.1} parent=5 // pred_region
        %s2310 = ssub.s32 %s26, 2
        // Predicated region
        $region105: #{tpu_custom_call.1} parent=103 // pred_check
          %p2311 = pneg %p354
        $region106: #{tpu_custom_call.1} parent=103 // pred_check_branch
          %2313 = sbr.rel (%p2311) target = $region108
        $region107: #{tpu_custom_call.1} parent=103 // pred_region
          %s2314 = sand.u32 %s339, 1
          %s2315 = scalar_lea.sflag [#allocation4], %s2314
          %s2316 = sand.u32 %s339, 1
          %s2317 = smul.addr %s2316, 64
          %s2318 = scalar_lea.vmem [#allocation11], %s2317
          %2319 = dma.done %s2315, 1024
        $region108: #{tpu_custom_call.1} parent=103 // pred_fallthru
          _
      $region104: #{tpu_custom_call.1} parent=5 // pred_fallthru
        _
    $region6: #{tpu_custom_call.1} parent=1 // loop_footer
      %s30 = sadd.s32 1, %s26
    $region7: #{tpu_custom_call.1} parent=1 // loop_footer_branch
      %25 = sbr.rel target = $region3
    $region8: #{tpu_custom_call.1} parent=1 // loop_exit
      _
    %2320 = vsyncpa [#allocation3], 1
    %s2321 = scalar_lea.sflag [#allocation3], 1
    %2322 = vsyncpa %s2321, 1
    %2323 = vsyncpa [#allocation6], 1
    %2324 = vsyncpa [#allocation9], 1
    %2325 = vsyncpa [#allocation4], 1
    %s2326 = scalar_lea.sflag [#allocation4], 1
    %2327 = vsyncpa %s2326, 1

</llo_original>
